<compile_context>
chip_gen: v5e
topology: v5e:2x2
jax: 0.10.0
libtpu: 0.0.40
codegen_flags: <defaults>
</compile_context>

<pallas_src>
import functools

import jax
import jax.numpy as jnp
import numpy as np
from jax.experimental import pallas as pl
from jax.experimental.pallas import tpu as pltpu  # noqa: F401  (TPU backend)


def gru_kernel(x_ref, w_ref, wu_ref, uzr_ref, uh_ref, b_ref, o_ref,
               *, t_in, t_out, batch, d, n_pad):
    """Entire GRU rollout in one kernel invocation (everything in VMEM).

    x_ref:   (t_in*batch, d)    time-major flattened input rows (row t*B + b)
    w_ref:   (d, n_pad)         [W_z | W_r | W_h | 0...]   (transposed vs nn.Linear)
    wu_ref:  (d, n_pad)         [W_z+U_z | W_r+U_r | W_h | 0...]  (phase-2 fold)
    uzr_ref: (d, n_pad)         [U_z | U_r | 0 | 0...]     (phase-1 recurrent)
    uh_ref:  (d, d)             U_h
    b_ref:   (1, n_pad)         [b_z | b_r | b_h | 0...]   (combined Linear biases)
    o_ref:   (batch, t_out*d)   lane-dense output slab: o[b, t*d:(t+1)*d] = h_t[b]
    """
    f32 = jnp.float32
    two_d = 2 * d

    w = w_ref[...]
    wu = wu_ref[...]
    uzr = uzr_ref[...]
    uh = uh_ref[...]
    b = b_ref[...]                                       # (1, n_pad)

    # Hoisted bias broadcast (reused by every unrolled phase-2 step).
    b_b = jnp.broadcast_to(b, (batch, n_pad))            # (B, n_pad)

    # Phase-1 W projections don't depend on h: one batched MXU call for all
    # input timesteps, biases folded in.  Padded columns stay exactly zero.
    xwb = jnp.dot(x_ref[...], w, preferred_element_type=f32) + b   # (t_in*B, n_pad)

    def gate_tail(preact, h):
        # preact: (B, n_pad) = [z_pre | r_pre | x@Wh + bh | 0...]
        zr = jax.nn.sigmoid(preact[:, :two_d])           # one EUP push for z and r
        z_t = zr[:, :d]
        r_t = zr[:, d:two_d]
        h_hat = jax.nn.sigmoid(
            preact[:, two_d:two_d + d]
            + jnp.dot(r_t * h, uh, preferred_element_type=f32))
        return (1.0 - z_t) * h + z_t * h_hat

    h = jnp.zeros((batch, d), f32)

    # Phase 1: consume the input sequence (fully unrolled, static indices).
    # Dependent-MXU chain per step: h @ Uzr, then (r*h) @ Uh.
    for i in range(t_in):
        preact = (xwb[i * batch:(i + 1) * batch, :]
                  + jnp.dot(h, uzr, preferred_element_type=f32))
        h = gate_tail(preact, h)

    # Phase 2: feed h back as the input.  The folded WU matrix means only two
    # dependent MXU ops per step; each h is stored at a static lane offset.
    for t in range(t_out):
        preact = jnp.dot(h, wu, preferred_element_type=f32) + b_b
        h = gate_tail(preact, h)
        o_ref[:, t * d:(t + 1) * d] = h.astype(o_ref.dtype)


@functools.partial(jax.jit, static_argnums=(2,))
def many_to_many_gru(x, params, output_times):
    """x: (B, T_in, D) float32. Returns (B, output_times, D) (PyTorch-scrambled)."""
    B, T_in, D = x.shape
    # Pad the gate-matmul N dimension to a full 128-lane tile.
    NP = max(128, ((3 * D + 127) // 128) * 128)

    def pad_n(m):
        return jnp.pad(m, ((0, 0), (0, NP - m.shape[1])))

    # TODO(synk): this time-major transpose is a separate (tiny) XLA HBM pass;
    # fold into a BlockSpec index_map at production sizes.
    x_rows = jnp.transpose(x, (1, 0, 2)).reshape(T_in * B, D)

    w_fused = pad_n(jnp.concatenate(
        [params["wz"], params["wr"], params["wh"]], axis=1))
    wu_fused = pad_n(jnp.concatenate(
        [params["wz"] + params["uz"],
         params["wr"] + params["ur"],
         params["wh"]], axis=1))
    uzr_fused = pad_n(jnp.concatenate([params["uz"], params["ur"]], axis=1))
    b_fused = pad_n(jnp.concatenate(
        [params["bz"], params["br"], params["bh"]], axis=1))

    out = pl.pallas_call(
        functools.partial(gru_kernel, t_in=T_in, t_out=output_times,
                          batch=B, d=D, n_pad=NP),
        out_shape=jax.ShapeDtypeStruct((B, output_times * D), jnp.float32),
        # No grid / specs: single invocation, full arrays resident in VMEM.
    )(x_rows, w_fused, wu_fused, uzr_fused, params["uh"], b_fused)

    # Kernel output is "natural" order: out[b, t*D:(t+1)*D] = h_t[b].
    # Reproduce torch.reshape(torch.cat(outputs, dim=0), (B, T_out, D)):
    nat = out.reshape(B, output_times, D)                       # [b, t] = h_t[b]
    cat = jnp.transpose(nat, (1, 0, 2)).reshape(output_times * B, D)  # row t*B+b
    return cat.reshape(B, output_times, D)                      # PyTorch scramble


def reference(x, p, output_times):
    """Pure-JAX reference matching the PyTorch module step by step."""
    B, T_in, D = x.shape
    h = jnp.zeros((B, D), jnp.float32)

    def step(h, xi):
        z = jax.nn.sigmoid(xi @ p["wz"] + h @ p["uz"] + p["bz"])
        r = jax.nn.sigmoid(xi @ p["wr"] + h @ p["ur"] + p["br"])
        hh = jax.nn.sigmoid(xi @ p["wh"] + (r * h) @ p["uh"] + p["bh"])
        return (1.0 - z) * h + z * hh

    for i in range(T_in):
        h = step(h, x[:, i, :])
    outs = []
    for _ in range(output_times):
        h = step(h, h)
        outs.append(h)
    res = jnp.concatenate(outs, axis=0)         # (T_out * B, D), cat along dim 0
    return res.reshape(B, output_times, D)      # PyTorch's scrambling reshape


def init_params(key, d):
    """Deterministic synthetic parameters (nn.Linear-style uniform init).

    bias=False in manyToManyGRU => the extra b_z/b_r/b_h are zero, but each
    nn.Linear still has its own bias; the two Linear biases of each gate are
    summed into one combined bias vector here.  Weights are stored transposed
    vs. nn.Linear, i.e. W has shape (D_in, D_out) so that x @ W == Linear(x).
    """
    bound = 1.0 / np.sqrt(d)
    ks = jax.random.split(key, 12)
    u = lambda k, shape: jax.random.uniform(k, shape, jnp.float32, -bound, bound)
    return {
        "wz": u(ks[0], (d, d)), "uz": u(ks[1], (d, d)),
        "wr": u(ks[2], (d, d)), "ur": u(ks[3], (d, d)),
        "wh": u(ks[4], (d, d)), "uh": u(ks[5], (d, d)),
        "bz": u(ks[6], (1, d)) + u(ks[7], (1, d)),   # b_{w_z} + b_{u_z} + 0
        "br": u(ks[8], (1, d)) + u(ks[9], (1, d)),
        "bh": u(ks[10], (1, d)) + u(ks[11], (1, d)),
    }


if __name__ == "__main__":
    B, T_IN, T_OUT, D = 2, 8, 4, 32   # input_times=8, output_times=4, sizes=32

    key = jax.random.PRNGKey(0)
    k_x, k_p = jax.random.split(key)
    x = jax.random.normal(k_x, (B, T_IN, D), jnp.float32)
    params = init_params(k_p, D)

    y = jax.block_until_ready(many_to_many_gru(x, params, T_OUT))
    y_ref = jax.block_until_ready(reference(x, params, T_OUT))

    np.testing.assert_allclose(np.asarray(y), np.asarray(y_ref),
                               rtol=1e-5, atol=1e-5)
    assert y.shape == (B, T_OUT, D)

    print("KERNEL_OK")
</pallas_src>

<mosaic_0001>
module attributes {stable_mosaic.version = 11 : i64} {
  func.func @gru_kernel(%arg0: memref<16x32xf32, #tpu.memory_space<vmem>>, %arg1: memref<32x128xf32, #tpu.memory_space<vmem>>, %arg2: memref<32x128xf32, #tpu.memory_space<vmem>>, %arg3: memref<32x128xf32, #tpu.memory_space<vmem>>, %arg4: memref<32x32xf32, #tpu.memory_space<vmem>>, %arg5: memref<1x128xf32, #tpu.memory_space<vmem>>, %arg6: memref<2x128xf32, #tpu.memory_space<vmem>>) attributes {dimension_semantics = [], scalar_prefetch = 0 : i64, scratch_operands = 0 : i64, tpu.core_type = #tpu.core_type<tc>} {
    %c0 = arith.constant 0 : index
    %c0_0 = arith.constant 0 : index
    %0 = vector.load %arg1[%c0, %c0_0] : memref<32x128xf32, #tpu.memory_space<vmem>>, vector<32x128xf32>
    %c0_1 = arith.constant 0 : index
    %c0_2 = arith.constant 0 : index
    %1 = vector.load %arg2[%c0_1, %c0_2] : memref<32x128xf32, #tpu.memory_space<vmem>>, vector<32x128xf32>
    %c0_3 = arith.constant 0 : index
    %c0_4 = arith.constant 0 : index
    %2 = vector.load %arg3[%c0_3, %c0_4] : memref<32x128xf32, #tpu.memory_space<vmem>>, vector<32x128xf32>
    %c0_5 = arith.constant 0 : index
    %c0_6 = arith.constant 0 : index
    %3 = vector.load %arg4[%c0_5, %c0_6] : memref<32x32xf32, #tpu.memory_space<vmem>>, vector<32x32xf32>
    %c0_7 = arith.constant 0 : index
    %c0_8 = arith.constant 0 : index
    %4 = vector.load %arg5[%c0_7, %c0_8] : memref<1x128xf32, #tpu.memory_space<vmem>>, vector<1x128xf32>
    %5 = vector.shape_cast %4 : vector<1x128xf32> to vector<1x128xf32>
    %6 = vector.broadcast %5 : vector<1x128xf32> to vector<2x128xf32>
    %c0_9 = arith.constant 0 : index
    %c0_10 = arith.constant 0 : index
    %7 = vector.load %arg0[%c0_9, %c0_10] : memref<16x32xf32, #tpu.memory_space<vmem>>, vector<16x32xf32>
    %cst = arith.constant dense<0.000000e+00> : vector<16x128xf32>
    %8 = tpu.matmul %7, %0, %cst {dimension_numbers = #tpu.dot_dimension_numbers<[1], [0], [0], [1], [0, 0, 1, 1], [], []>} : vector<16x32xf32>, vector<32x128xf32>, vector<16x128xf32> -> vector<16x128xf32>
    %9 = vector.broadcast %4 : vector<1x128xf32> to vector<16x128xf32>
    %10 = arith.addf %8, %9 : vector<16x128xf32>
    %cst_11 = arith.constant 0.000000e+00 : f32
    %11 = vector.broadcast %cst_11 : f32 to vector<2x32xf32>
    %12 = vector.extract_strided_slice %10 {offsets = [0, 0], sizes = [2, 128], strides = [1, 1]} : vector<16x128xf32> to vector<2x128xf32>
    %cst_12 = arith.constant dense<0.000000e+00> : vector<2x128xf32>
    %13 = tpu.matmul %11, %2, %cst_12 {dimension_numbers = #tpu.dot_dimension_numbers<[1], [0], [0], [1], [0, 0, 1, 1], [], []>} : vector<2x32xf32>, vector<32x128xf32>, vector<2x128xf32> -> vector<2x128xf32>
    %14 = arith.addf %12, %13 : vector<2x128xf32>
    %15 = vector.extract_strided_slice %14 {offsets = [0, 0], sizes = [2, 64], strides = [1, 1]} : vector<2x128xf32> to vector<2x64xf32>
    %16 = arith.negf %15 : vector<2x64xf32>
    %17 = math.exp %16 : vector<2x64xf32>
    %cst_13 = arith.constant 1.000000e+00 : f32
    %18 = vector.broadcast %cst_13 : f32 to vector<2x64xf32>
    %19 = arith.addf %18, %17 : vector<2x64xf32>
    %20 = arith.divf %18, %19 : vector<2x64xf32>
    %21 = vector.extract_strided_slice %20 {offsets = [0, 0], sizes = [2, 32], strides = [1, 1]} : vector<2x64xf32> to vector<2x32xf32>
    %22 = vector.extract_strided_slice %20 {offsets = [0, 32], sizes = [2, 32], strides = [1, 1]} : vector<2x64xf32> to vector<2x32xf32>
    %23 = vector.extract_strided_slice %14 {offsets = [0, 64], sizes = [2, 32], strides = [1, 1]} : vector<2x128xf32> to vector<2x32xf32>
    %24 = arith.mulf %22, %11 : vector<2x32xf32>
    %cst_14 = arith.constant dense<0.000000e+00> : vector<2x32xf32>
    %25 = tpu.matmul %24, %3, %cst_14 {dimension_numbers = #tpu.dot_dimension_numbers<[1], [0], [0], [1], [0, 0, 1, 1], [], []>} : vector<2x32xf32>, vector<32x32xf32>, vector<2x32xf32> -> vector<2x32xf32>
    %26 = arith.addf %23, %25 : vector<2x32xf32>
    %27 = arith.negf %26 : vector<2x32xf32>
    %28 = math.exp %27 : vector<2x32xf32>
    %cst_15 = arith.constant 1.000000e+00 : f32
    %29 = vector.broadcast %cst_15 : f32 to vector<2x32xf32>
    %30 = arith.addf %29, %28 : vector<2x32xf32>
    %31 = arith.divf %29, %30 : vector<2x32xf32>
    %cst_16 = arith.constant 1.000000e+00 : f32
    %32 = vector.broadcast %cst_16 : f32 to vector<2x32xf32>
    %33 = arith.subf %32, %21 : vector<2x32xf32>
    %34 = arith.mulf %33, %11 : vector<2x32xf32>
    %35 = arith.mulf %21, %31 : vector<2x32xf32>
    %36 = arith.addf %34, %35 : vector<2x32xf32>
    %37 = vector.extract_strided_slice %10 {offsets = [2, 0], sizes = [2, 128], strides = [1, 1]} : vector<16x128xf32> to vector<2x128xf32>
    %cst_17 = arith.constant dense<0.000000e+00> : vector<2x128xf32>
    %38 = tpu.matmul %36, %2, %cst_17 {dimension_numbers = #tpu.dot_dimension_numbers<[1], [0], [0], [1], [0, 0, 1, 1], [], []>} : vector<2x32xf32>, vector<32x128xf32>, vector<2x128xf32> -> vector<2x128xf32>
    %39 = arith.addf %37, %38 : vector<2x128xf32>
    %40 = vector.extract_strided_slice %39 {offsets = [0, 0], sizes = [2, 64], strides = [1, 1]} : vector<2x128xf32> to vector<2x64xf32>
    %41 = arith.negf %40 : vector<2x64xf32>
    %42 = math.exp %41 : vector<2x64xf32>
    %cst_18 = arith.constant 1.000000e+00 : f32
    %43 = vector.broadcast %cst_18 : f32 to vector<2x64xf32>
    %44 = arith.addf %43, %42 : vector<2x64xf32>
    %45 = arith.divf %43, %44 : vector<2x64xf32>
    %46 = vector.extract_strided_slice %45 {offsets = [0, 0], sizes = [2, 32], strides = [1, 1]} : vector<2x64xf32> to vector<2x32xf32>
    %47 = vector.extract_strided_slice %45 {offsets = [0, 32], sizes = [2, 32], strides = [1, 1]} : vector<2x64xf32> to vector<2x32xf32>
    %48 = vector.extract_strided_slice %39 {offsets = [0, 64], sizes = [2, 32], strides = [1, 1]} : vector<2x128xf32> to vector<2x32xf32>
    %49 = arith.mulf %47, %36 : vector<2x32xf32>
    %cst_19 = arith.constant dense<0.000000e+00> : vector<2x32xf32>
    %50 = tpu.matmul %49, %3, %cst_19 {dimension_numbers = #tpu.dot_dimension_numbers<[1], [0], [0], [1], [0, 0, 1, 1], [], []>} : vector<2x32xf32>, vector<32x32xf32>, vector<2x32xf32> -> vector<2x32xf32>
    %51 = arith.addf %48, %50 : vector<2x32xf32>
    %52 = arith.negf %51 : vector<2x32xf32>
    %53 = math.exp %52 : vector<2x32xf32>
    %cst_20 = arith.constant 1.000000e+00 : f32
    %54 = vector.broadcast %cst_20 : f32 to vector<2x32xf32>
    %55 = arith.addf %54, %53 : vector<2x32xf32>
    %56 = arith.divf %54, %55 : vector<2x32xf32>
    %cst_21 = arith.constant 1.000000e+00 : f32
    %57 = vector.broadcast %cst_21 : f32 to vector<2x32xf32>
    %58 = arith.subf %57, %46 : vector<2x32xf32>
    %59 = arith.mulf %58, %36 : vector<2x32xf32>
    %60 = arith.mulf %46, %56 : vector<2x32xf32>
    %61 = arith.addf %59, %60 : vector<2x32xf32>
    %62 = vector.extract_strided_slice %10 {offsets = [4, 0], sizes = [2, 128], strides = [1, 1]} : vector<16x128xf32> to vector<2x128xf32>
    %cst_22 = arith.constant dense<0.000000e+00> : vector<2x128xf32>
    %63 = tpu.matmul %61, %2, %cst_22 {dimension_numbers = #tpu.dot_dimension_numbers<[1], [0], [0], [1], [0, 0, 1, 1], [], []>} : vector<2x32xf32>, vector<32x128xf32>, vector<2x128xf32> -> vector<2x128xf32>
    %64 = arith.addf %62, %63 : vector<2x128xf32>
    %65 = vector.extract_strided_slice %64 {offsets = [0, 0], sizes = [2, 64], strides = [1, 1]} : vector<2x128xf32> to vector<2x64xf32>
    %66 = arith.negf %65 : vector<2x64xf32>
    %67 = math.exp %66 : vector<2x64xf32>
    %cst_23 = arith.constant 1.000000e+00 : f32
    %68 = vector.broadcast %cst_23 : f32 to vector<2x64xf32>
    %69 = arith.addf %68, %67 : vector<2x64xf32>
    %70 = arith.divf %68, %69 : vector<2x64xf32>
    %71 = vector.extract_strided_slice %70 {offsets = [0, 0], sizes = [2, 32], strides = [1, 1]} : vector<2x64xf32> to vector<2x32xf32>
    %72 = vector.extract_strided_slice %70 {offsets = [0, 32], sizes = [2, 32], strides = [1, 1]} : vector<2x64xf32> to vector<2x32xf32>
    %73 = vector.extract_strided_slice %64 {offsets = [0, 64], sizes = [2, 32], strides = [1, 1]} : vector<2x128xf32> to vector<2x32xf32>
    %74 = arith.mulf %72, %61 : vector<2x32xf32>
    %cst_24 = arith.constant dense<0.000000e+00> : vector<2x32xf32>
    %75 = tpu.matmul %74, %3, %cst_24 {dimension_numbers = #tpu.dot_dimension_numbers<[1], [0], [0], [1], [0, 0, 1, 1], [], []>} : vector<2x32xf32>, vector<32x32xf32>, vector<2x32xf32> -> vector<2x32xf32>
    %76 = arith.addf %73, %75 : vector<2x32xf32>
    %77 = arith.negf %76 : vector<2x32xf32>
    %78 = math.exp %77 : vector<2x32xf32>
    %cst_25 = arith.constant 1.000000e+00 : f32
    %79 = vector.broadcast %cst_25 : f32 to vector<2x32xf32>
    %80 = arith.addf %79, %78 : vector<2x32xf32>
    %81 = arith.divf %79, %80 : vector<2x32xf32>
    %cst_26 = arith.constant 1.000000e+00 : f32
    %82 = vector.broadcast %cst_26 : f32 to vector<2x32xf32>
    %83 = arith.subf %82, %71 : vector<2x32xf32>
    %84 = arith.mulf %83, %61 : vector<2x32xf32>
    %85 = arith.mulf %71, %81 : vector<2x32xf32>
    %86 = arith.addf %84, %85 : vector<2x32xf32>
    %87 = vector.extract_strided_slice %10 {offsets = [6, 0], sizes = [2, 128], strides = [1, 1]} : vector<16x128xf32> to vector<2x128xf32>
    %cst_27 = arith.constant dense<0.000000e+00> : vector<2x128xf32>
    %88 = tpu.matmul %86, %2, %cst_27 {dimension_numbers = #tpu.dot_dimension_numbers<[1], [0], [0], [1], [0, 0, 1, 1], [], []>} : vector<2x32xf32>, vector<32x128xf32>, vector<2x128xf32> -> vector<2x128xf32>
    %89 = arith.addf %87, %88 : vector<2x128xf32>
    %90 = vector.extract_strided_slice %89 {offsets = [0, 0], sizes = [2, 64], strides = [1, 1]} : vector<2x128xf32> to vector<2x64xf32>
    %91 = arith.negf %90 : vector<2x64xf32>
    %92 = math.exp %91 : vector<2x64xf32>
    %cst_28 = arith.constant 1.000000e+00 : f32
    %93 = vector.broadcast %cst_28 : f32 to vector<2x64xf32>
    %94 = arith.addf %93, %92 : vector<2x64xf32>
    %95 = arith.divf %93, %94 : vector<2x64xf32>
    %96 = vector.extract_strided_slice %95 {offsets = [0, 0], sizes = [2, 32], strides = [1, 1]} : vector<2x64xf32> to vector<2x32xf32>
    %97 = vector.extract_strided_slice %95 {offsets = [0, 32], sizes = [2, 32], strides = [1, 1]} : vector<2x64xf32> to vector<2x32xf32>
    %98 = vector.extract_strided_slice %89 {offsets = [0, 64], sizes = [2, 32], strides = [1, 1]} : vector<2x128xf32> to vector<2x32xf32>
    %99 = arith.mulf %97, %86 : vector<2x32xf32>
    %cst_29 = arith.constant dense<0.000000e+00> : vector<2x32xf32>
    %100 = tpu.matmul %99, %3, %cst_29 {dimension_numbers = #tpu.dot_dimension_numbers<[1], [0], [0], [1], [0, 0, 1, 1], [], []>} : vector<2x32xf32>, vector<32x32xf32>, vector<2x32xf32> -> vector<2x32xf32>
    %101 = arith.addf %98, %100 : vector<2x32xf32>
    %102 = arith.negf %101 : vector<2x32xf32>
    %103 = math.exp %102 : vector<2x32xf32>
    %cst_30 = arith.constant 1.000000e+00 : f32
    %104 = vector.broadcast %cst_30 : f32 to vector<2x32xf32>
    %105 = arith.addf %104, %103 : vector<2x32xf32>
    %106 = arith.divf %104, %105 : vector<2x32xf32>
    %cst_31 = arith.constant 1.000000e+00 : f32
    %107 = vector.broadcast %cst_31 : f32 to vector<2x32xf32>
    %108 = arith.subf %107, %96 : vector<2x32xf32>
    %109 = arith.mulf %108, %86 : vector<2x32xf32>
    %110 = arith.mulf %96, %106 : vector<2x32xf32>
    %111 = arith.addf %109, %110 : vector<2x32xf32>
    %112 = vector.extract_strided_slice %10 {offsets = [8, 0], sizes = [2, 128], strides = [1, 1]} : vector<16x128xf32> to vector<2x128xf32>
    %cst_32 = arith.constant dense<0.000000e+00> : vector<2x128xf32>
    %113 = tpu.matmul %111, %2, %cst_32 {dimension_numbers = #tpu.dot_dimension_numbers<[1], [0], [0], [1], [0, 0, 1, 1], [], []>} : vector<2x32xf32>, vector<32x128xf32>, vector<2x128xf32> -> vector<2x128xf32>
    %114 = arith.addf %112, %113 : vector<2x128xf32>
    %115 = vector.extract_strided_slice %114 {offsets = [0, 0], sizes = [2, 64], strides = [1, 1]} : vector<2x128xf32> to vector<2x64xf32>
    %116 = arith.negf %115 : vector<2x64xf32>
    %117 = math.exp %116 : vector<2x64xf32>
    %cst_33 = arith.constant 1.000000e+00 : f32
    %118 = vector.broadcast %cst_33 : f32 to vector<2x64xf32>
    %119 = arith.addf %118, %117 : vector<2x64xf32>
    %120 = arith.divf %118, %119 : vector<2x64xf32>
    %121 = vector.extract_strided_slice %120 {offsets = [0, 0], sizes = [2, 32], strides = [1, 1]} : vector<2x64xf32> to vector<2x32xf32>
    %122 = vector.extract_strided_slice %120 {offsets = [0, 32], sizes = [2, 32], strides = [1, 1]} : vector<2x64xf32> to vector<2x32xf32>
    %123 = vector.extract_strided_slice %114 {offsets = [0, 64], sizes = [2, 32], strides = [1, 1]} : vector<2x128xf32> to vector<2x32xf32>
    %124 = arith.mulf %122, %111 : vector<2x32xf32>
    %cst_34 = arith.constant dense<0.000000e+00> : vector<2x32xf32>
    %125 = tpu.matmul %124, %3, %cst_34 {dimension_numbers = #tpu.dot_dimension_numbers<[1], [0], [0], [1], [0, 0, 1, 1], [], []>} : vector<2x32xf32>, vector<32x32xf32>, vector<2x32xf32> -> vector<2x32xf32>
    %126 = arith.addf %123, %125 : vector<2x32xf32>
    %127 = arith.negf %126 : vector<2x32xf32>
    %128 = math.exp %127 : vector<2x32xf32>
    %cst_35 = arith.constant 1.000000e+00 : f32
    %129 = vector.broadcast %cst_35 : f32 to vector<2x32xf32>
    %130 = arith.addf %129, %128 : vector<2x32xf32>
    %131 = arith.divf %129, %130 : vector<2x32xf32>
    %cst_36 = arith.constant 1.000000e+00 : f32
    %132 = vector.broadcast %cst_36 : f32 to vector<2x32xf32>
    %133 = arith.subf %132, %121 : vector<2x32xf32>
    %134 = arith.mulf %133, %111 : vector<2x32xf32>
    %135 = arith.mulf %121, %131 : vector<2x32xf32>
    %136 = arith.addf %134, %135 : vector<2x32xf32>
    %137 = vector.extract_strided_slice %10 {offsets = [10, 0], sizes = [2, 128], strides = [1, 1]} : vector<16x128xf32> to vector<2x128xf32>
    %cst_37 = arith.constant dense<0.000000e+00> : vector<2x128xf32>
    %138 = tpu.matmul %136, %2, %cst_37 {dimension_numbers = #tpu.dot_dimension_numbers<[1], [0], [0], [1], [0, 0, 1, 1], [], []>} : vector<2x32xf32>, vector<32x128xf32>, vector<2x128xf32> -> vector<2x128xf32>
    %139 = arith.addf %137, %138 : vector<2x128xf32>
    %140 = vector.extract_strided_slice %139 {offsets = [0, 0], sizes = [2, 64], strides = [1, 1]} : vector<2x128xf32> to vector<2x64xf32>
    %141 = arith.negf %140 : vector<2x64xf32>
    %142 = math.exp %141 : vector<2x64xf32>
    %cst_38 = arith.constant 1.000000e+00 : f32
    %143 = vector.broadcast %cst_38 : f32 to vector<2x64xf32>
    %144 = arith.addf %143, %142 : vector<2x64xf32>
    %145 = arith.divf %143, %144 : vector<2x64xf32>
    %146 = vector.extract_strided_slice %145 {offsets = [0, 0], sizes = [2, 32], strides = [1, 1]} : vector<2x64xf32> to vector<2x32xf32>
    %147 = vector.extract_strided_slice %145 {offsets = [0, 32], sizes = [2, 32], strides = [1, 1]} : vector<2x64xf32> to vector<2x32xf32>
    %148 = vector.extract_strided_slice %139 {offsets = [0, 64], sizes = [2, 32], strides = [1, 1]} : vector<2x128xf32> to vector<2x32xf32>
    %149 = arith.mulf %147, %136 : vector<2x32xf32>
    %cst_39 = arith.constant dense<0.000000e+00> : vector<2x32xf32>
    %150 = tpu.matmul %149, %3, %cst_39 {dimension_numbers = #tpu.dot_dimension_numbers<[1], [0], [0], [1], [0, 0, 1, 1], [], []>} : vector<2x32xf32>, vector<32x32xf32>, vector<2x32xf32> -> vector<2x32xf32>
    %151 = arith.addf %148, %150 : vector<2x32xf32>
    %152 = arith.negf %151 : vector<2x32xf32>
    %153 = math.exp %152 : vector<2x32xf32>
    %cst_40 = arith.constant 1.000000e+00 : f32
    %154 = vector.broadcast %cst_40 : f32 to vector<2x32xf32>
    %155 = arith.addf %154, %153 : vector<2x32xf32>
    %156 = arith.divf %154, %155 : vector<2x32xf32>
    %cst_41 = arith.constant 1.000000e+00 : f32
    %157 = vector.broadcast %cst_41 : f32 to vector<2x32xf32>
    %158 = arith.subf %157, %146 : vector<2x32xf32>
    %159 = arith.mulf %158, %136 : vector<2x32xf32>
    %160 = arith.mulf %146, %156 : vector<2x32xf32>
    %161 = arith.addf %159, %160 : vector<2x32xf32>
    %162 = vector.extract_strided_slice %10 {offsets = [12, 0], sizes = [2, 128], strides = [1, 1]} : vector<16x128xf32> to vector<2x128xf32>
    %cst_42 = arith.constant dense<0.000000e+00> : vector<2x128xf32>
    %163 = tpu.matmul %161, %2, %cst_42 {dimension_numbers = #tpu.dot_dimension_numbers<[1], [0], [0], [1], [0, 0, 1, 1], [], []>} : vector<2x32xf32>, vector<32x128xf32>, vector<2x128xf32> -> vector<2x128xf32>
    %164 = arith.addf %162, %163 : vector<2x128xf32>
    %165 = vector.extract_strided_slice %164 {offsets = [0, 0], sizes = [2, 64], strides = [1, 1]} : vector<2x128xf32> to vector<2x64xf32>
    %166 = arith.negf %165 : vector<2x64xf32>
    %167 = math.exp %166 : vector<2x64xf32>
    %cst_43 = arith.constant 1.000000e+00 : f32
    %168 = vector.broadcast %cst_43 : f32 to vector<2x64xf32>
    %169 = arith.addf %168, %167 : vector<2x64xf32>
    %170 = arith.divf %168, %169 : vector<2x64xf32>
    %171 = vector.extract_strided_slice %170 {offsets = [0, 0], sizes = [2, 32], strides = [1, 1]} : vector<2x64xf32> to vector<2x32xf32>
    %172 = vector.extract_strided_slice %170 {offsets = [0, 32], sizes = [2, 32], strides = [1, 1]} : vector<2x64xf32> to vector<2x32xf32>
    %173 = vector.extract_strided_slice %164 {offsets = [0, 64], sizes = [2, 32], strides = [1, 1]} : vector<2x128xf32> to vector<2x32xf32>
    %174 = arith.mulf %172, %161 : vector<2x32xf32>
    %cst_44 = arith.constant dense<0.000000e+00> : vector<2x32xf32>
    %175 = tpu.matmul %174, %3, %cst_44 {dimension_numbers = #tpu.dot_dimension_numbers<[1], [0], [0], [1], [0, 0, 1, 1], [], []>} : vector<2x32xf32>, vector<32x32xf32>, vector<2x32xf32> -> vector<2x32xf32>
    %176 = arith.addf %173, %175 : vector<2x32xf32>
    %177 = arith.negf %176 : vector<2x32xf32>
    %178 = math.exp %177 : vector<2x32xf32>
    %cst_45 = arith.constant 1.000000e+00 : f32
    %179 = vector.broadcast %cst_45 : f32 to vector<2x32xf32>
    %180 = arith.addf %179, %178 : vector<2x32xf32>
    %181 = arith.divf %179, %180 : vector<2x32xf32>
    %cst_46 = arith.constant 1.000000e+00 : f32
    %182 = vector.broadcast %cst_46 : f32 to vector<2x32xf32>
    %183 = arith.subf %182, %171 : vector<2x32xf32>
    %184 = arith.mulf %183, %161 : vector<2x32xf32>
    %185 = arith.mulf %171, %181 : vector<2x32xf32>
    %186 = arith.addf %184, %185 : vector<2x32xf32>
    %187 = vector.extract_strided_slice %10 {offsets = [14, 0], sizes = [2, 128], strides = [1, 1]} : vector<16x128xf32> to vector<2x128xf32>
    %cst_47 = arith.constant dense<0.000000e+00> : vector<2x128xf32>
    %188 = tpu.matmul %186, %2, %cst_47 {dimension_numbers = #tpu.dot_dimension_numbers<[1], [0], [0], [1], [0, 0, 1, 1], [], []>} : vector<2x32xf32>, vector<32x128xf32>, vector<2x128xf32> -> vector<2x128xf32>
    %189 = arith.addf %187, %188 : vector<2x128xf32>
    %190 = vector.extract_strided_slice %189 {offsets = [0, 0], sizes = [2, 64], strides = [1, 1]} : vector<2x128xf32> to vector<2x64xf32>
    %191 = arith.negf %190 : vector<2x64xf32>
    %192 = math.exp %191 : vector<2x64xf32>
    %cst_48 = arith.constant 1.000000e+00 : f32
    %193 = vector.broadcast %cst_48 : f32 to vector<2x64xf32>
    %194 = arith.addf %193, %192 : vector<2x64xf32>
    %195 = arith.divf %193, %194 : vector<2x64xf32>
    %196 = vector.extract_strided_slice %195 {offsets = [0, 0], sizes = [2, 32], strides = [1, 1]} : vector<2x64xf32> to vector<2x32xf32>
    %197 = vector.extract_strided_slice %195 {offsets = [0, 32], sizes = [2, 32], strides = [1, 1]} : vector<2x64xf32> to vector<2x32xf32>
    %198 = vector.extract_strided_slice %189 {offsets = [0, 64], sizes = [2, 32], strides = [1, 1]} : vector<2x128xf32> to vector<2x32xf32>
    %199 = arith.mulf %197, %186 : vector<2x32xf32>
    %cst_49 = arith.constant dense<0.000000e+00> : vector<2x32xf32>
    %200 = tpu.matmul %199, %3, %cst_49 {dimension_numbers = #tpu.dot_dimension_numbers<[1], [0], [0], [1], [0, 0, 1, 1], [], []>} : vector<2x32xf32>, vector<32x32xf32>, vector<2x32xf32> -> vector<2x32xf32>
    %201 = arith.addf %198, %200 : vector<2x32xf32>
    %202 = arith.negf %201 : vector<2x32xf32>
    %203 = math.exp %202 : vector<2x32xf32>
    %cst_50 = arith.constant 1.000000e+00 : f32
    %204 = vector.broadcast %cst_50 : f32 to vector<2x32xf32>
    %205 = arith.addf %204, %203 : vector<2x32xf32>
    %206 = arith.divf %204, %205 : vector<2x32xf32>
    %cst_51 = arith.constant 1.000000e+00 : f32
    %207 = vector.broadcast %cst_51 : f32 to vector<2x32xf32>
    %208 = arith.subf %207, %196 : vector<2x32xf32>
    %209 = arith.mulf %208, %186 : vector<2x32xf32>
    %210 = arith.mulf %196, %206 : vector<2x32xf32>
    %211 = arith.addf %209, %210 : vector<2x32xf32>
    %cst_52 = arith.constant dense<0.000000e+00> : vector<2x128xf32>
    %212 = tpu.matmul %211, %1, %cst_52 {dimension_numbers = #tpu.dot_dimension_numbers<[1], [0], [0], [1], [0, 0, 1, 1], [], []>} : vector<2x32xf32>, vector<32x128xf32>, vector<2x128xf32> -> vector<2x128xf32>
    %213 = arith.addf %212, %6 : vector<2x128xf32>
    %214 = vector.extract_strided_slice %213 {offsets = [0, 0], sizes = [2, 64], strides = [1, 1]} : vector<2x128xf32> to vector<2x64xf32>
    %215 = arith.negf %214 : vector<2x64xf32>
    %216 = math.exp %215 : vector<2x64xf32>
    %cst_53 = arith.constant 1.000000e+00 : f32
    %217 = vector.broadcast %cst_53 : f32 to vector<2x64xf32>
    %218 = arith.addf %217, %216 : vector<2x64xf32>
    %219 = arith.divf %217, %218 : vector<2x64xf32>
    %220 = vector.extract_strided_slice %219 {offsets = [0, 0], sizes = [2, 32], strides = [1, 1]} : vector<2x64xf32> to vector<2x32xf32>
    %221 = vector.extract_strided_slice %219 {offsets = [0, 32], sizes = [2, 32], strides = [1, 1]} : vector<2x64xf32> to vector<2x32xf32>
    %222 = vector.extract_strided_slice %213 {offsets = [0, 64], sizes = [2, 32], strides = [1, 1]} : vector<2x128xf32> to vector<2x32xf32>
    %223 = arith.mulf %221, %211 : vector<2x32xf32>
    %cst_54 = arith.constant dense<0.000000e+00> : vector<2x32xf32>
    %224 = tpu.matmul %223, %3, %cst_54 {dimension_numbers = #tpu.dot_dimension_numbers<[1], [0], [0], [1], [0, 0, 1, 1], [], []>} : vector<2x32xf32>, vector<32x32xf32>, vector<2x32xf32> -> vector<2x32xf32>
    %225 = arith.addf %222, %224 : vector<2x32xf32>
    %226 = arith.negf %225 : vector<2x32xf32>
    %227 = math.exp %226 : vector<2x32xf32>
    %cst_55 = arith.constant 1.000000e+00 : f32
    %228 = vector.broadcast %cst_55 : f32 to vector<2x32xf32>
    %229 = arith.addf %228, %227 : vector<2x32xf32>
    %230 = arith.divf %228, %229 : vector<2x32xf32>
    %cst_56 = arith.constant 1.000000e+00 : f32
    %231 = vector.broadcast %cst_56 : f32 to vector<2x32xf32>
    %232 = arith.subf %231, %220 : vector<2x32xf32>
    %233 = arith.mulf %232, %211 : vector<2x32xf32>
    %234 = arith.mulf %220, %230 : vector<2x32xf32>
    %235 = arith.addf %233, %234 : vector<2x32xf32>
    %c0_57 = arith.constant 0 : index
    %c0_58 = arith.constant 0 : index
    %236 = vector.load %arg6[%c0_57, %c0_58] : memref<2x128xf32, #tpu.memory_space<vmem>>, vector<2x32xf32>
    tpu.vector_store %arg6[%c0_57, %c0_58], %235 {strides = array<i32>} : memref<2x128xf32, #tpu.memory_space<vmem>>, vector<2x32xf32>,
    %cst_59 = arith.constant dense<0.000000e+00> : vector<2x128xf32>
    %237 = tpu.matmul %235, %1, %cst_59 {dimension_numbers = #tpu.dot_dimension_numbers<[1], [0], [0], [1], [0, 0, 1, 1], [], []>} : vector<2x32xf32>, vector<32x128xf32>, vector<2x128xf32> -> vector<2x128xf32>
    %238 = arith.addf %237, %6 : vector<2x128xf32>
    %239 = vector.extract_strided_slice %238 {offsets = [0, 0], sizes = [2, 64], strides = [1, 1]} : vector<2x128xf32> to vector<2x64xf32>
    %240 = arith.negf %239 : vector<2x64xf32>
    %241 = math.exp %240 : vector<2x64xf32>
    %cst_60 = arith.constant 1.000000e+00 : f32
    %242 = vector.broadcast %cst_60 : f32 to vector<2x64xf32>
    %243 = arith.addf %242, %241 : vector<2x64xf32>
    %244 = arith.divf %242, %243 : vector<2x64xf32>
    %245 = vector.extract_strided_slice %244 {offsets = [0, 0], sizes = [2, 32], strides = [1, 1]} : vector<2x64xf32> to vector<2x32xf32>
    %246 = vector.extract_strided_slice %244 {offsets = [0, 32], sizes = [2, 32], strides = [1, 1]} : vector<2x64xf32> to vector<2x32xf32>
    %247 = vector.extract_strided_slice %238 {offsets = [0, 64], sizes = [2, 32], strides = [1, 1]} : vector<2x128xf32> to vector<2x32xf32>
    %248 = arith.mulf %246, %235 : vector<2x32xf32>
    %cst_61 = arith.constant dense<0.000000e+00> : vector<2x32xf32>
    %249 = tpu.matmul %248, %3, %cst_61 {dimension_numbers = #tpu.dot_dimension_numbers<[1], [0], [0], [1], [0, 0, 1, 1], [], []>} : vector<2x32xf32>, vector<32x32xf32>, vector<2x32xf32> -> vector<2x32xf32>
    %250 = arith.addf %247, %249 : vector<2x32xf32>
    %251 = arith.negf %250 : vector<2x32xf32>
    %252 = math.exp %251 : vector<2x32xf32>
    %cst_62 = arith.constant 1.000000e+00 : f32
    %253 = vector.broadcast %cst_62 : f32 to vector<2x32xf32>
    %254 = arith.addf %253, %252 : vector<2x32xf32>
    %255 = arith.divf %253, %254 : vector<2x32xf32>
    %cst_63 = arith.constant 1.000000e+00 : f32
    %256 = vector.broadcast %cst_63 : f32 to vector<2x32xf32>
    %257 = arith.subf %256, %245 : vector<2x32xf32>
    %258 = arith.mulf %257, %235 : vector<2x32xf32>
    %259 = arith.mulf %245, %255 : vector<2x32xf32>
    %260 = arith.addf %258, %259 : vector<2x32xf32>
    %c0_64 = arith.constant 0 : index
    %c32 = arith.constant 32 : index
    %261 = vector.load %arg6[%c0_64, %c32] : memref<2x128xf32, #tpu.memory_space<vmem>>, vector<2x32xf32>
    tpu.vector_store %arg6[%c0_64, %c32], %260 {strides = array<i32>} : memref<2x128xf32, #tpu.memory_space<vmem>>, vector<2x32xf32>,
    %cst_65 = arith.constant dense<0.000000e+00> : vector<2x128xf32>
    %262 = tpu.matmul %260, %1, %cst_65 {dimension_numbers = #tpu.dot_dimension_numbers<[1], [0], [0], [1], [0, 0, 1, 1], [], []>} : vector<2x32xf32>, vector<32x128xf32>, vector<2x128xf32> -> vector<2x128xf32>
    %263 = arith.addf %262, %6 : vector<2x128xf32>
    %264 = vector.extract_strided_slice %263 {offsets = [0, 0], sizes = [2, 64], strides = [1, 1]} : vector<2x128xf32> to vector<2x64xf32>
    %265 = arith.negf %264 : vector<2x64xf32>
    %266 = math.exp %265 : vector<2x64xf32>
    %cst_66 = arith.constant 1.000000e+00 : f32
    %267 = vector.broadcast %cst_66 : f32 to vector<2x64xf32>
    %268 = arith.addf %267, %266 : vector<2x64xf32>
    %269 = arith.divf %267, %268 : vector<2x64xf32>
    %270 = vector.extract_strided_slice %269 {offsets = [0, 0], sizes = [2, 32], strides = [1, 1]} : vector<2x64xf32> to vector<2x32xf32>
    %271 = vector.extract_strided_slice %269 {offsets = [0, 32], sizes = [2, 32], strides = [1, 1]} : vector<2x64xf32> to vector<2x32xf32>
    %272 = vector.extract_strided_slice %263 {offsets = [0, 64], sizes = [2, 32], strides = [1, 1]} : vector<2x128xf32> to vector<2x32xf32>
    %273 = arith.mulf %271, %260 : vector<2x32xf32>
    %cst_67 = arith.constant dense<0.000000e+00> : vector<2x32xf32>
    %274 = tpu.matmul %273, %3, %cst_67 {dimension_numbers = #tpu.dot_dimension_numbers<[1], [0], [0], [1], [0, 0, 1, 1], [], []>} : vector<2x32xf32>, vector<32x32xf32>, vector<2x32xf32> -> vector<2x32xf32>
    %275 = arith.addf %272, %274 : vector<2x32xf32>
    %276 = arith.negf %275 : vector<2x32xf32>
    %277 = math.exp %276 : vector<2x32xf32>
    %cst_68 = arith.constant 1.000000e+00 : f32
    %278 = vector.broadcast %cst_68 : f32 to vector<2x32xf32>
    %279 = arith.addf %278, %277 : vector<2x32xf32>
    %280 = arith.divf %278, %279 : vector<2x32xf32>
    %cst_69 = arith.constant 1.000000e+00 : f32
    %281 = vector.broadcast %cst_69 : f32 to vector<2x32xf32>
    %282 = arith.subf %281, %270 : vector<2x32xf32>
    %283 = arith.mulf %282, %260 : vector<2x32xf32>
    %284 = arith.mulf %270, %280 : vector<2x32xf32>
    %285 = arith.addf %283, %284 : vector<2x32xf32>
    %c0_70 = arith.constant 0 : index
    %c64 = arith.constant 64 : index
    %286 = vector.load %arg6[%c0_70, %c64] : memref<2x128xf32, #tpu.memory_space<vmem>>, vector<2x32xf32>
    tpu.vector_store %arg6[%c0_70, %c64], %285 {strides = array<i32>} : memref<2x128xf32, #tpu.memory_space<vmem>>, vector<2x32xf32>,
    %cst_71 = arith.constant dense<0.000000e+00> : vector<2x128xf32>
    %287 = tpu.matmul %285, %1, %cst_71 {dimension_numbers = #tpu.dot_dimension_numbers<[1], [0], [0], [1], [0, 0, 1, 1], [], []>} : vector<2x32xf32>, vector<32x128xf32>, vector<2x128xf32> -> vector<2x128xf32>
    %288 = arith.addf %287, %6 : vector<2x128xf32>
    %289 = vector.extract_strided_slice %288 {offsets = [0, 0], sizes = [2, 64], strides = [1, 1]} : vector<2x128xf32> to vector<2x64xf32>
    %290 = arith.negf %289 : vector<2x64xf32>
    %291 = math.exp %290 : vector<2x64xf32>
    %cst_72 = arith.constant 1.000000e+00 : f32
    %292 = vector.broadcast %cst_72 : f32 to vector<2x64xf32>
    %293 = arith.addf %292, %291 : vector<2x64xf32>
    %294 = arith.divf %292, %293 : vector<2x64xf32>
    %295 = vector.extract_strided_slice %294 {offsets = [0, 0], sizes = [2, 32], strides = [1, 1]} : vector<2x64xf32> to vector<2x32xf32>
    %296 = vector.extract_strided_slice %294 {offsets = [0, 32], sizes = [2, 32], strides = [1, 1]} : vector<2x64xf32> to vector<2x32xf32>
    %297 = vector.extract_strided_slice %288 {offsets = [0, 64], sizes = [2, 32], strides = [1, 1]} : vector<2x128xf32> to vector<2x32xf32>
    %298 = arith.mulf %296, %285 : vector<2x32xf32>
    %cst_73 = arith.constant dense<0.000000e+00> : vector<2x32xf32>
    %299 = tpu.matmul %298, %3, %cst_73 {dimension_numbers = #tpu.dot_dimension_numbers<[1], [0], [0], [1], [0, 0, 1, 1], [], []>} : vector<2x32xf32>, vector<32x32xf32>, vector<2x32xf32> -> vector<2x32xf32>
    %300 = arith.addf %297, %299 : vector<2x32xf32>
    %301 = arith.negf %300 : vector<2x32xf32>
    %302 = math.exp %301 : vector<2x32xf32>
    %cst_74 = arith.constant 1.000000e+00 : f32
    %303 = vector.broadcast %cst_74 : f32 to vector<2x32xf32>
    %304 = arith.addf %303, %302 : vector<2x32xf32>
    %305 = arith.divf %303, %304 : vector<2x32xf32>
    %cst_75 = arith.constant 1.000000e+00 : f32
    %306 = vector.broadcast %cst_75 : f32 to vector<2x32xf32>
    %307 = arith.subf %306, %295 : vector<2x32xf32>
    %308 = arith.mulf %307, %285 : vector<2x32xf32>
    %309 = arith.mulf %295, %305 : vector<2x32xf32>
    %310 = arith.addf %308, %309 : vector<2x32xf32>
    %c0_76 = arith.constant 0 : index
    %c96 = arith.constant 96 : index
    %311 = vector.load %arg6[%c0_76, %c96] : memref<2x128xf32, #tpu.memory_space<vmem>>, vector<2x32xf32>
    tpu.vector_store %arg6[%c0_76, %c96], %310 {strides = array<i32>} : memref<2x128xf32, #tpu.memory_space<vmem>>, vector<2x32xf32>,
    return
  }
}

</mosaic_0001>

<llo_original>
// kernel: many_to_many_gru.1
$region0: #{many_to_many_gru.1}
  #allocation0 [shape = 'u32[]', space=smem, size = 0x4, offset = 0x4, fixed_abs, tag = 'smem constant byte address 0x4 - core index']
  #allocation1 [shape = 'u32[72,128]{1,0:T(1,128)}', space=vmem, size = 0x9000, scoped, tag = 'internal scratch']
  %s0 = inlined_call_operand.vmem [shape: f32[16,32], index: 0, kind: input, shape index: {}]
  %s1 = inlined_call_operand.vmem [shape: f32[32,128], index: 1, kind: input, shape index: {}]
  %s2 = inlined_call_operand.vmem [shape: f32[32,128], index: 2, kind: input, shape index: {}]
  %s3 = inlined_call_operand.vmem [shape: f32[32,128], index: 3, kind: input, shape index: {}]
  %s4 = inlined_call_operand.vmem [shape: f32[32,32], index: 4, kind: input, shape index: {}]
  %s5 = inlined_call_operand.vmem [shape: f32[1,128], index: 5, kind: input, shape index: {}]
  %s6 = inlined_call_operand.vmem [shape: f32[2,128], index: 6, kind: output, shape index: {}]
  %s7 = sld [smem:[#allocation0]]
  $region34: #{many_to_many_gru.1} parent=0
    _
  %s9 = ssub.s32 1, %s7
  %s10 = scalar_select 0, %s9, %s7
  // Predicated region
  $region2: #{many_to_many_gru.1} parent=0 // pred_check
    _
  $region3: #{many_to_many_gru.1} parent=0 // pred_check_branch
    %12 = sbr.rel (0) target = $region5
  $region4: #{many_to_many_gru.1} parent=0 // pred_region
    _
  $region5: #{many_to_many_gru.1} parent=0 // pred_fallthru
    _
  // Predicated region
  $region6: #{many_to_many_gru.1} parent=0 // pred_check
    _
  $region7: #{many_to_many_gru.1} parent=0 // pred_check_branch
    %14 = sbr.rel (0) target = $region9
  $region8: #{many_to_many_gru.1} parent=0 // pred_region
    _
  $region9: #{many_to_many_gru.1} parent=0 // pred_fallthru
    _
  // Predicated region
  $region10: #{many_to_many_gru.1} parent=0 // pred_check
    _
  $region11: #{many_to_many_gru.1} parent=0 // pred_check_branch
    %16 = sbr.rel (0) target = $region13
  $region12: #{many_to_many_gru.1} parent=0 // pred_region
    _
  $region13: #{many_to_many_gru.1} parent=0 // pred_fallthru
    _
  // Predicated region
  $region14: #{many_to_many_gru.1} parent=0 // pred_check
    _
  $region15: #{many_to_many_gru.1} parent=0 // pred_check_branch
    %18 = sbr.rel (0) target = $region17
  $region16: #{many_to_many_gru.1} parent=0 // pred_region
    _
  $region17: #{many_to_many_gru.1} parent=0 // pred_fallthru
    _
  // Predicated region
  $region18: #{many_to_many_gru.1} parent=0 // pred_check
    _
  $region19: #{many_to_many_gru.1} parent=0 // pred_check_branch
    %20 = sbr.rel (0) target = $region21
  $region20: #{many_to_many_gru.1} parent=0 // pred_region
    _
  $region21: #{many_to_many_gru.1} parent=0 // pred_fallthru
    _
  // Predicated region
  $region22: #{many_to_many_gru.1} parent=0 // pred_check
    _
  $region23: #{many_to_many_gru.1} parent=0 // pred_check_branch
    %22 = sbr.rel (0) target = $region25
  $region24: #{many_to_many_gru.1} parent=0 // pred_region
    _
  $region25: #{many_to_many_gru.1} parent=0 // pred_fallthru
    _
  %v23 = vld [vmem:[%s1] sm:$0xff]
  %v24 = vld [vmem:[%s1 + $0x8] sm:$0xff]
  %v25 = vld [vmem:[%s1 + $0x10] sm:$0xff]
  %v26 = vld [vmem:[%s1 + $0x18] sm:$0xff]
  %v27 = vld [vmem:[%s2] sm:$0xff]
  %v28 = vld [vmem:[%s2 + $0x8] sm:$0xff]
  %v29 = vld [vmem:[%s2 + $0x10] sm:$0xff]
  %v30 = vld [vmem:[%s2 + $0x18] sm:$0xff]
  %v31 = vld [vmem:[%s3] sm:$0xff]
  %v32 = vld [vmem:[%s3 + $0x8] sm:$0xff]
  %v33 = vld [vmem:[%s3 + $0x10] sm:$0xff]
  %v34 = vld [vmem:[%s3 + $0x18] sm:$0xff]
  %v35 = vld [vmem:[%s4] sm:$0xff]
  %v36 = vld [vmem:[%s4 + $0x8] sm:$0xff]
  %v37 = vld [vmem:[%s4 + $0x10] sm:$0xff]
  %v38 = vld [vmem:[%s4 + $0x18] sm:$0xff]
  %v39 = vld [vmem:[%s5] sm:$0x1]
  %v41 = vperm.slane %v39, 0
  %v43 = vld [vmem:[%s0] sm:$0xff]
  %v44 = vld [vmem:[%s0 + $0x8] sm:$0xff]
  %vm45 = vcmask 261120
  %v47 = vsel %vm45, %v43, 0
  %v50 = vsel %vm45, %v44, 0
  %52 = vmatpush.msra.mxu0 0.0
  %53 = vmatpush.msra.mxu0 0.0
  %54 = vmatpush.msra.mxu0 0.0
  %55 = vmatpush.msra.mxu0 0.0
  %56 = vmatpush.msra.mxu0 0.0
  %57 = vmatpush.msra.mxu0 0.0
  %58 = vmatpush.msra.mxu0 0.0
  %59 = vmatpush.msra.mxu0 0.0
  %60 = vmatpush.msra.mxu0 0.0
  %61 = vmatpush.msra.mxu0 0.0
  %62 = vmatpush.msra.mxu0 0.0
  %63 = vmatpush.msra.mxu0 0.0
  %64 = vmatpush.msra.mxu0 %v26
  %65 = vmatpush.msra.mxu0 %v25
  %66 = vmatpush.msra.mxu0 %v24
  %67 = vmatpush.msra.mxu0 %v23
  %68 = vmatmul.f32.gmra.mxu0 %v47
  %v69 = vpop.f32.mrf.mxu0
  %v70 = vadd.f32 %v41, %v69
  %71 = vmatmul.f32.gmra.mxu0 %v50
  %v72 = vpop.f32.mrf.mxu0
  %v73 = vadd.f32 %v41, %v72
  %74 = vdwg.mxu0
  %v76 = vsel %vm45, 0.0, 0
  %78 = vmatpush.msra.mxu0 0.0
  %79 = vmatpush.msra.mxu0 0.0
  %80 = vmatpush.msra.mxu0 0.0
  %81 = vmatpush.msra.mxu0 0.0
  %82 = vmatpush.msra.mxu0 0.0
  %83 = vmatpush.msra.mxu0 0.0
  %84 = vmatpush.msra.mxu0 0.0
  %85 = vmatpush.msra.mxu0 0.0
  %86 = vmatpush.msra.mxu0 0.0
  %87 = vmatpush.msra.mxu0 0.0
  %88 = vmatpush.msra.mxu0 0.0
  %89 = vmatpush.msra.mxu0 0.0
  %90 = vmatpush.msra.mxu0 %v34
  %91 = vmatpush.msra.mxu0 %v33
  %92 = vmatpush.msra.mxu0 %v32
  %93 = vmatpush.msra.mxu0 %v31
  %94 = vmatmul.f32.gmra.mxu0 %v76
  %v95 = vpop.f32.mrf.mxu0
  %v96 = vadd.f32 0.0, %v95
  %97 = vdwg.mxu0
  %v98 = vadd.f32 %v70, %v96
  %v99 = vxor.u32 %v98, 2147483648
  %v100 = vmul.f32 %v99, 1.442695
  %v101 = vpow.pop %v100
  %v102 = vadd.f32 %v101, 1.0
  %v103 = vrcp.pop %v102
  %v104 = vmul.f32 %v102, %v103
  %v105 = vsub.f32 1.0, %v104
  %v106 = vmul.f32 %v103, %v105
  %v107 = vadd.f32 %v103, %v106
  %vm108 = vweird.f32 %v102
  %vm109 = vweird.f32 %v103
  %vm110 = vmor %vm108, %vm109
  %v111 = vsel %vm110, %v103, %v107
  %v112 = vand.u32 2147483647, %v102
  %vm113 = vcmp.eq.f32.partialorder %v112, 8.507059e+37
  %v114 = vand.u32 %v102, 2147483648
  %v115 = vor.u32 1.1754944e-38, %v114
  %v116 = vsel %vm113, %v115, %v111
  %v117 = vmul.f32 1.0, %v116
  %v118 = vmul.f32 %v117, 0.0
  %120 = vrot.lane.b32.xlu0 %v118, 96
  %v121 = vpop.permute.xlu0 %120
  %v122 = vsel %vm45, %v121, 0
  %124 = vmatpush.msra.mxu0 0.0
  %125 = vmatpush.msra.mxu0 0.0
  %126 = vmatpush.msra.mxu0 0.0
  %127 = vmatpush.msra.mxu0 0.0
  %128 = vmatpush.msra.mxu0 0.0
  %129 = vmatpush.msra.mxu0 0.0
  %130 = vmatpush.msra.mxu0 0.0
  %131 = vmatpush.msra.mxu0 0.0
  %132 = vmatpush.msra.mxu0 0.0
  %133 = vmatpush.msra.mxu0 0.0
  %134 = vmatpush.msra.mxu0 0.0
  %135 = vmatpush.msra.mxu0 0.0
  %136 = vmatpush.msra.mxu0 %v38
  %137 = vmatpush.msra.mxu0 %v37
  %138 = vmatpush.msra.mxu0 %v36
  %139 = vmatpush.msra.mxu0 %v35
  %140 = vmatmul.f32.gmra.mxu0 %v122
  %v141 = vpop.f32.mrf.mxu0
  %v142 = vadd.f32 0.0, %v141
  %143 = vdwg.mxu0
  %145 = vrot.lane.b32.xlu0 %v142, 64
  %v146 = vpop.permute.xlu0 %145
  %v148 = vadd.f32 %v98, %v146
  %v149 = vxor.u32 %v148, 2147483648
  %v150 = vmul.f32 %v149, 1.442695
  %v151 = vpow.pop %v150
  %v152 = vadd.f32 %v151, 1.0
  %v153 = vrcp.pop %v152
  %v154 = vmul.f32 %v152, %v153
  %v155 = vsub.f32 1.0, %v154
  %v156 = vmul.f32 %v153, %v155
  %v157 = vadd.f32 %v153, %v156
  %vm158 = vweird.f32 %v152
  %vm159 = vweird.f32 %v153
  %vm160 = vmor %vm158, %vm159
  %v161 = vsel %vm160, %v153, %v157
  %v162 = vand.u32 2147483647, %v152
  %vm163 = vcmp.eq.f32.partialorder %v162, 8.507059e+37
  %v164 = vand.u32 %v152, 2147483648
  %v165 = vor.u32 1.1754944e-38, %v164
  %v166 = vsel %vm163, %v165, %v161
  %v167 = vmul.f32 1.0, %v166
  %v168 = vsub.f32 1.0, %v117
  %v169 = vmul.f32 %v168, 0.0
  %171 = vrot.lane.b32.xlu0 %v167, 64
  %v172 = vpop.permute.xlu0 %171
  %v174 = vmul.f32 %v117, %v172
  %v175 = vadd.f32 %v169, %v174
  %v177 = vsel %vm45, %v175, 0
  %179 = vmatpush.msra.mxu0 0.0
  %180 = vmatpush.msra.mxu0 0.0
  %181 = vmatpush.msra.mxu0 0.0
  %182 = vmatpush.msra.mxu0 0.0
  %183 = vmatpush.msra.mxu0 0.0
  %184 = vmatpush.msra.mxu0 0.0
  %185 = vmatpush.msra.mxu0 0.0
  %186 = vmatpush.msra.mxu0 0.0
  %187 = vmatpush.msra.mxu0 0.0
  %188 = vmatpush.msra.mxu0 0.0
  %189 = vmatpush.msra.mxu0 0.0
  %190 = vmatpush.msra.mxu0 0.0
  %191 = vmatpush.msra.mxu0 %v34
  %192 = vmatpush.msra.mxu0 %v33
  %193 = vmatpush.msra.mxu0 %v32
  %194 = vmatpush.msra.mxu0 %v31
  %195 = vmatmul.f32.gmra.mxu0 %v177
  %v196 = vpop.f32.mrf.mxu0
  %v197 = vadd.f32 0.0, %v196
  %198 = vdwg.mxu0
  %v200 = vrot.slane %v197, 6
  %v202 = vadd.f32 %v70, %v200
  %v203 = vxor.u32 %v202, 2147483648
  %v204 = vmul.f32 %v203, 1.442695
  %v205 = vpow.pop %v204
  %v206 = vadd.f32 %v205, 1.0
  %v207 = vrcp.pop %v206
  %v208 = vmul.f32 %v206, %v207
  %v209 = vsub.f32 1.0, %v208
  %v210 = vmul.f32 %v207, %v209
  %v211 = vadd.f32 %v207, %v210
  %vm212 = vweird.f32 %v206
  %vm213 = vweird.f32 %v207
  %vm214 = vmor %vm212, %vm213
  %v215 = vsel %vm214, %v207, %v211
  %v216 = vand.u32 2147483647, %v206
  %vm217 = vcmp.eq.f32.partialorder %v216, 8.507059e+37
  %v218 = vand.u32 %v206, 2147483648
  %v219 = vor.u32 1.1754944e-38, %v218
  %v220 = vsel %vm217, %v219, %v215
  %v221 = vmul.f32 1.0, %v220
  %v222 = vrot.slane %v175, 6
  %223 = vrot.lane.b32.xlu0 %v222, 32
  %v224 = vpop.permute.xlu0 %223
  %v226 = vmul.f32 %v221, %v224
  %v228 = vrot.slane %v226, 2
  %229 = vrot.lane.b32.xlu0 %v228, 96
  %v230 = vpop.permute.xlu0 %229
  %v231 = vsel %vm45, %v230, 0
  %233 = vmatpush.msra.mxu0 0.0
  %234 = vmatpush.msra.mxu0 0.0
  %235 = vmatpush.msra.mxu0 0.0
  %236 = vmatpush.msra.mxu0 0.0
  %237 = vmatpush.msra.mxu0 0.0
  %238 = vmatpush.msra.mxu0 0.0
  %239 = vmatpush.msra.mxu0 0.0
  %240 = vmatpush.msra.mxu0 0.0
  %241 = vmatpush.msra.mxu0 0.0
  %242 = vmatpush.msra.mxu0 0.0
  %243 = vmatpush.msra.mxu0 0.0
  %244 = vmatpush.msra.mxu0 0.0
  %245 = vmatpush.msra.mxu0 %v38
  %246 = vmatpush.msra.mxu0 %v37
  %247 = vmatpush.msra.mxu0 %v36
  %248 = vmatpush.msra.mxu0 %v35
  %249 = vmatmul.f32.gmra.mxu0 %v231
  %v250 = vpop.f32.mrf.mxu0
  %v251 = vadd.f32 0.0, %v250
  %252 = vdwg.mxu0
  %v254 = vrot.slane %v251, 6
  %255 = vrot.lane.b32.xlu0 %v254, 64
  %v256 = vpop.permute.xlu0 %255
  %v258 = vadd.f32 %v202, %v256
  %v259 = vxor.u32 %v258, 2147483648
  %v260 = vmul.f32 %v259, 1.442695
  %v261 = vpow.pop %v260
  %v262 = vadd.f32 %v261, 1.0
  %v263 = vrcp.pop %v262
  %v264 = vmul.f32 %v262, %v263
  %v265 = vsub.f32 1.0, %v264
  %v266 = vmul.f32 %v263, %v265
  %v267 = vadd.f32 %v263, %v266
  %vm268 = vweird.f32 %v262
  %vm269 = vweird.f32 %v263
  %vm270 = vmor %vm268, %vm269
  %v271 = vsel %vm270, %v263, %v267
  %v272 = vand.u32 2147483647, %v262
  %vm273 = vcmp.eq.f32.partialorder %v272, 8.507059e+37
  %v274 = vand.u32 %v262, 2147483648
  %v275 = vor.u32 1.1754944e-38, %v274
  %v276 = vsel %vm273, %v275, %v271
  %v277 = vmul.f32 1.0, %v276
  %v278 = vsub.f32 1.0, %v221
  %v280 = vmul.f32 %v278, %v222
  %282 = vrot.lane.b32.xlu0 %v277, 64
  %v283 = vpop.permute.xlu0 %282
  %v285 = vmul.f32 %v221, %v283
  %v286 = vadd.f32 %v280, %v285
  %v288 = vrot.slane %v286, 2
  %v289 = vsel %vm45, %v288, 0
  %291 = vmatpush.msra.mxu0 0.0
  %292 = vmatpush.msra.mxu0 0.0
  %293 = vmatpush.msra.mxu0 0.0
  %294 = vmatpush.msra.mxu0 0.0
  %295 = vmatpush.msra.mxu0 0.0
  %296 = vmatpush.msra.mxu0 0.0
  %297 = vmatpush.msra.mxu0 0.0
  %298 = vmatpush.msra.mxu0 0.0
  %299 = vmatpush.msra.mxu0 0.0
  %300 = vmatpush.msra.mxu0 0.0
  %301 = vmatpush.msra.mxu0 0.0
  %302 = vmatpush.msra.mxu0 0.0
  %303 = vmatpush.msra.mxu0 %v34
  %304 = vmatpush.msra.mxu0 %v33
  %305 = vmatpush.msra.mxu0 %v32
  %306 = vmatpush.msra.mxu0 %v31
  %307 = vmatmul.f32.gmra.mxu0 %v289
  %v308 = vpop.f32.mrf.mxu0
  %v309 = vadd.f32 0.0, %v308
  %310 = vdwg.mxu0
  %v312 = vrot.slane %v309, 4
  %v314 = vadd.f32 %v70, %v312
  %v315 = vxor.u32 %v314, 2147483648
  %v316 = vmul.f32 %v315, 1.442695
  %v317 = vpow.pop %v316
  %v318 = vadd.f32 %v317, 1.0
  %v319 = vrcp.pop %v318
  %v320 = vmul.f32 %v318, %v319
  %v321 = vsub.f32 1.0, %v320
  %v322 = vmul.f32 %v319, %v321
  %v323 = vadd.f32 %v319, %v322
  %vm324 = vweird.f32 %v318
  %vm325 = vweird.f32 %v319
  %vm326 = vmor %vm324, %vm325
  %v327 = vsel %vm326, %v319, %v323
  %v328 = vand.u32 2147483647, %v318
  %vm329 = vcmp.eq.f32.partialorder %v328, 8.507059e+37
  %v330 = vand.u32 %v318, 2147483648
  %v331 = vor.u32 1.1754944e-38, %v330
  %v332 = vsel %vm329, %v331, %v327
  %v333 = vmul.f32 1.0, %v332
  %v334 = vrot.slane %v286, 6
  %335 = vrot.lane.b32.xlu0 %v334, 32
  %v336 = vpop.permute.xlu0 %335
  %v338 = vmul.f32 %v333, %v336
  %v340 = vrot.slane %v338, 4
  %341 = vrot.lane.b32.xlu0 %v340, 96
  %v342 = vpop.permute.xlu0 %341
  %v343 = vsel %vm45, %v342, 0
  %345 = vmatpush.msra.mxu0 0.0
  %346 = vmatpush.msra.mxu0 0.0
  %347 = vmatpush.msra.mxu0 0.0
  %348 = vmatpush.msra.mxu0 0.0
  %349 = vmatpush.msra.mxu0 0.0
  %350 = vmatpush.msra.mxu0 0.0
  %351 = vmatpush.msra.mxu0 0.0
  %352 = vmatpush.msra.mxu0 0.0
  %353 = vmatpush.msra.mxu0 0.0
  %354 = vmatpush.msra.mxu0 0.0
  %355 = vmatpush.msra.mxu0 0.0
  %356 = vmatpush.msra.mxu0 0.0
  %357 = vmatpush.msra.mxu0 %v38
  %358 = vmatpush.msra.mxu0 %v37
  %359 = vmatpush.msra.mxu0 %v36
  %360 = vmatpush.msra.mxu0 %v35
  %361 = vmatmul.f32.gmra.mxu0 %v343
  %v362 = vpop.f32.mrf.mxu0
  %v363 = vadd.f32 0.0, %v362
  %364 = vdwg.mxu0
  %v366 = vrot.slane %v363, 4
  %367 = vrot.lane.b32.xlu0 %v366, 64
  %v368 = vpop.permute.xlu0 %367
  %v370 = vadd.f32 %v314, %v368
  %v371 = vxor.u32 %v370, 2147483648
  %v372 = vmul.f32 %v371, 1.442695
  %v373 = vpow.pop %v372
  %v374 = vadd.f32 %v373, 1.0
  %v375 = vrcp.pop %v374
  %v376 = vmul.f32 %v374, %v375
  %v377 = vsub.f32 1.0, %v376
  %v378 = vmul.f32 %v375, %v377
  %v379 = vadd.f32 %v375, %v378
  %vm380 = vweird.f32 %v374
  %vm381 = vweird.f32 %v375
  %vm382 = vmor %vm380, %vm381
  %v383 = vsel %vm382, %v375, %v379
  %v384 = vand.u32 2147483647, %v374
  %vm385 = vcmp.eq.f32.partialorder %v384, 8.507059e+37
  %v386 = vand.u32 %v374, 2147483648
  %v387 = vor.u32 1.1754944e-38, %v386
  %v388 = vsel %vm385, %v387, %v383
  %v389 = vmul.f32 1.0, %v388
  %v390 = vsub.f32 1.0, %v333
  %v392 = vmul.f32 %v390, %v334
  %394 = vrot.lane.b32.xlu0 %v389, 64
  %v395 = vpop.permute.xlu0 %394
  %v397 = vmul.f32 %v333, %v395
  %v398 = vadd.f32 %v392, %v397
  %v400 = vrot.slane %v398, 4
  %v401 = vsel %vm45, %v400, 0
  %403 = vmatpush.msra.mxu0 0.0
  %404 = vmatpush.msra.mxu0 0.0
  %405 = vmatpush.msra.mxu0 0.0
  %406 = vmatpush.msra.mxu0 0.0
  %407 = vmatpush.msra.mxu0 0.0
  %408 = vmatpush.msra.mxu0 0.0
  %409 = vmatpush.msra.mxu0 0.0
  %410 = vmatpush.msra.mxu0 0.0
  %411 = vmatpush.msra.mxu0 0.0
  %412 = vmatpush.msra.mxu0 0.0
  %413 = vmatpush.msra.mxu0 0.0
  %414 = vmatpush.msra.mxu0 0.0
  %415 = vmatpush.msra.mxu0 %v34
  %416 = vmatpush.msra.mxu0 %v33
  %417 = vmatpush.msra.mxu0 %v32
  %418 = vmatpush.msra.mxu0 %v31
  %419 = vmatmul.f32.gmra.mxu0 %v401
  %v420 = vpop.f32.mrf.mxu0
  %v421 = vadd.f32 0.0, %v420
  %422 = vdwg.mxu0
  %v424 = vrot.slane %v421, 2
  %v426 = vadd.f32 %v70, %v424
  %v427 = vxor.u32 %v426, 2147483648
  %v428 = vmul.f32 %v427, 1.442695
  %v429 = vpow.pop %v428
  %v430 = vadd.f32 %v429, 1.0
  %v431 = vrcp.pop %v430
  %v432 = vmul.f32 %v430, %v431
  %v433 = vsub.f32 1.0, %v432
  %v434 = vmul.f32 %v431, %v433
  %v435 = vadd.f32 %v431, %v434
  %vm436 = vweird.f32 %v430
  %vm437 = vweird.f32 %v431
  %vm438 = vmor %vm436, %vm437
  %v439 = vsel %vm438, %v431, %v435
  %v440 = vand.u32 2147483647, %v430
  %vm441 = vcmp.eq.f32.partialorder %v440, 8.507059e+37
  %v442 = vand.u32 %v430, 2147483648
  %v443 = vor.u32 1.1754944e-38, %v442
  %v444 = vsel %vm441, %v443, %v439
  %v445 = vmul.f32 1.0, %v444
  %v446 = vrot.slane %v398, 6
  %447 = vrot.lane.b32.xlu0 %v446, 32
  %v448 = vpop.permute.xlu0 %447
  %v450 = vmul.f32 %v445, %v448
  %v452 = vrot.slane %v450, 6
  %453 = vrot.lane.b32.xlu0 %v452, 96
  %v454 = vpop.permute.xlu0 %453
  %v455 = vsel %vm45, %v454, 0
  %457 = vmatpush.msra.mxu0 0.0
  %458 = vmatpush.msra.mxu0 0.0
  %459 = vmatpush.msra.mxu0 0.0
  %460 = vmatpush.msra.mxu0 0.0
  %461 = vmatpush.msra.mxu0 0.0
  %462 = vmatpush.msra.mxu0 0.0
  %463 = vmatpush.msra.mxu0 0.0
  %464 = vmatpush.msra.mxu0 0.0
  %465 = vmatpush.msra.mxu0 0.0
  %466 = vmatpush.msra.mxu0 0.0
  %467 = vmatpush.msra.mxu0 0.0
  %468 = vmatpush.msra.mxu0 0.0
  %469 = vmatpush.msra.mxu0 %v38
  %470 = vmatpush.msra.mxu0 %v37
  %471 = vmatpush.msra.mxu0 %v36
  %472 = vmatpush.msra.mxu0 %v35
  %473 = vmatmul.f32.gmra.mxu0 %v455
  %v474 = vpop.f32.mrf.mxu0
  %v475 = vadd.f32 0.0, %v474
  %476 = vdwg.mxu0
  %v478 = vrot.slane %v475, 2
  %479 = vrot.lane.b32.xlu0 %v478, 64
  %v480 = vpop.permute.xlu0 %479
  %v482 = vadd.f32 %v426, %v480
  %v483 = vxor.u32 %v482, 2147483648
  %v484 = vmul.f32 %v483, 1.442695
  %v485 = vpow.pop %v484
  %v486 = vadd.f32 %v485, 1.0
  %v487 = vrcp.pop %v486
  %v488 = vmul.f32 %v486, %v487
  %v489 = vsub.f32 1.0, %v488
  %v490 = vmul.f32 %v487, %v489
  %v491 = vadd.f32 %v487, %v490
  %vm492 = vweird.f32 %v486
  %vm493 = vweird.f32 %v487
  %vm494 = vmor %vm492, %vm493
  %v495 = vsel %vm494, %v487, %v491
  %v496 = vand.u32 2147483647, %v486
  %vm497 = vcmp.eq.f32.partialorder %v496, 8.507059e+37
  %v498 = vand.u32 %v486, 2147483648
  %v499 = vor.u32 1.1754944e-38, %v498
  %v500 = vsel %vm497, %v499, %v495
  %v501 = vmul.f32 1.0, %v500
  %v502 = vsub.f32 1.0, %v445
  %v504 = vmul.f32 %v502, %v446
  %506 = vrot.lane.b32.xlu0 %v501, 64
  %v507 = vpop.permute.xlu0 %506
  %v509 = vmul.f32 %v445, %v507
  %v510 = vadd.f32 %v504, %v509
  %v512 = vrot.slane %v510, 6
  %v513 = vsel %vm45, %v512, 0
  %515 = vmatpush.msra.mxu0 0.0
  %516 = vmatpush.msra.mxu0 0.0
  %517 = vmatpush.msra.mxu0 0.0
  %518 = vmatpush.msra.mxu0 0.0
  %519 = vmatpush.msra.mxu0 0.0
  %520 = vmatpush.msra.mxu0 0.0
  %521 = vmatpush.msra.mxu0 0.0
  %522 = vmatpush.msra.mxu0 0.0
  %523 = vmatpush.msra.mxu0 0.0
  %524 = vmatpush.msra.mxu0 0.0
  %525 = vmatpush.msra.mxu0 0.0
  %526 = vmatpush.msra.mxu0 0.0
  %527 = vmatpush.msra.mxu0 %v34
  %528 = vmatpush.msra.mxu0 %v33
  %529 = vmatpush.msra.mxu0 %v32
  %530 = vmatpush.msra.mxu0 %v31
  %531 = vmatmul.f32.gmra.mxu0 %v513
  %v532 = vpop.f32.mrf.mxu0
  %v533 = vadd.f32 0.0, %v532
  %534 = vdwg.mxu0
  %v535 = vadd.f32 %v73, %v533
  %v536 = vxor.u32 %v535, 2147483648
  %v537 = vmul.f32 %v536, 1.442695
  %v538 = vpow.pop %v537
  %v539 = vadd.f32 %v538, 1.0
  %v540 = vrcp.pop %v539
  %v541 = vmul.f32 %v539, %v540
  %v542 = vsub.f32 1.0, %v541
  %v543 = vmul.f32 %v540, %v542
  %v544 = vadd.f32 %v540, %v543
  %vm545 = vweird.f32 %v539
  %vm546 = vweird.f32 %v540
  %vm547 = vmor %vm545, %vm546
  %v548 = vsel %vm547, %v540, %v544
  %v549 = vand.u32 2147483647, %v539
  %vm550 = vcmp.eq.f32.partialorder %v549, 8.507059e+37
  %v551 = vand.u32 %v539, 2147483648
  %v552 = vor.u32 1.1754944e-38, %v551
  %v553 = vsel %vm550, %v552, %v548
  %v554 = vmul.f32 1.0, %v553
  %555 = vrot.lane.b32.xlu0 %v512, 32
  %v556 = vpop.permute.xlu0 %555
  %v558 = vmul.f32 %v554, %v556
  %560 = vrot.lane.b32.xlu0 %v558, 96
  %v561 = vpop.permute.xlu0 %560
  %v562 = vsel %vm45, %v561, 0
  %564 = vmatpush.msra.mxu0 0.0
  %565 = vmatpush.msra.mxu0 0.0
  %566 = vmatpush.msra.mxu0 0.0
  %567 = vmatpush.msra.mxu0 0.0
  %568 = vmatpush.msra.mxu0 0.0
  %569 = vmatpush.msra.mxu0 0.0
  %570 = vmatpush.msra.mxu0 0.0
  %571 = vmatpush.msra.mxu0 0.0
  %572 = vmatpush.msra.mxu0 0.0
  %573 = vmatpush.msra.mxu0 0.0
  %574 = vmatpush.msra.mxu0 0.0
  %575 = vmatpush.msra.mxu0 0.0
  %576 = vmatpush.msra.mxu0 %v38
  %577 = vmatpush.msra.mxu0 %v37
  %578 = vmatpush.msra.mxu0 %v36
  %579 = vmatpush.msra.mxu0 %v35
  %580 = vmatmul.f32.gmra.mxu0 %v562
  %v581 = vpop.f32.mrf.mxu0
  %v582 = vadd.f32 0.0, %v581
  %583 = vdwg.mxu0
  %585 = vrot.lane.b32.xlu0 %v582, 64
  %v586 = vpop.permute.xlu0 %585
  %v588 = vadd.f32 %v535, %v586
  %v589 = vxor.u32 %v588, 2147483648
  %v590 = vmul.f32 %v589, 1.442695
  %v591 = vpow.pop %v590
  %v592 = vadd.f32 %v591, 1.0
  %v593 = vrcp.pop %v592
  %v594 = vmul.f32 %v592, %v593
  %v595 = vsub.f32 1.0, %v594
  %v596 = vmul.f32 %v593, %v595
  %v597 = vadd.f32 %v593, %v596
  %vm598 = vweird.f32 %v592
  %vm599 = vweird.f32 %v593
  %vm600 = vmor %vm598, %vm599
  %v601 = vsel %vm600, %v593, %v597
  %v602 = vand.u32 2147483647, %v592
  %vm603 = vcmp.eq.f32.partialorder %v602, 8.507059e+37
  %v604 = vand.u32 %v592, 2147483648
  %v605 = vor.u32 1.1754944e-38, %v604
  %v606 = vsel %vm603, %v605, %v601
  %v607 = vmul.f32 1.0, %v606
  %v608 = vsub.f32 1.0, %v554
  %v610 = vmul.f32 %v608, %v512
  %612 = vrot.lane.b32.xlu0 %v607, 64
  %v613 = vpop.permute.xlu0 %612
  %v615 = vmul.f32 %v554, %v613
  %v616 = vadd.f32 %v610, %v615
  %v618 = vsel %vm45, %v616, 0
  %620 = vmatpush.msra.mxu0 0.0
  %621 = vmatpush.msra.mxu0 0.0
  %622 = vmatpush.msra.mxu0 0.0
  %623 = vmatpush.msra.mxu0 0.0
  %624 = vmatpush.msra.mxu0 0.0
  %625 = vmatpush.msra.mxu0 0.0
  %626 = vmatpush.msra.mxu0 0.0
  %627 = vmatpush.msra.mxu0 0.0
  %628 = vmatpush.msra.mxu0 0.0
  %629 = vmatpush.msra.mxu0 0.0
  %630 = vmatpush.msra.mxu0 0.0
  %631 = vmatpush.msra.mxu0 0.0
  %632 = vmatpush.msra.mxu0 %v34
  %633 = vmatpush.msra.mxu0 %v33
  %634 = vmatpush.msra.mxu0 %v32
  %635 = vmatpush.msra.mxu0 %v31
  %636 = vmatmul.f32.gmra.mxu0 %v618
  %v637 = vpop.f32.mrf.mxu0
  %v638 = vadd.f32 0.0, %v637
  %639 = vdwg.mxu0
  %v641 = vrot.slane %v638, 6
  %v643 = vadd.f32 %v73, %v641
  %v644 = vxor.u32 %v643, 2147483648
  %v645 = vmul.f32 %v644, 1.442695
  %v646 = vpow.pop %v645
  %v647 = vadd.f32 %v646, 1.0
  %v648 = vrcp.pop %v647
  %v649 = vmul.f32 %v647, %v648
  %v650 = vsub.f32 1.0, %v649
  %v651 = vmul.f32 %v648, %v650
  %v652 = vadd.f32 %v648, %v651
  %vm653 = vweird.f32 %v647
  %vm654 = vweird.f32 %v648
  %vm655 = vmor %vm653, %vm654
  %v656 = vsel %vm655, %v648, %v652
  %v657 = vand.u32 2147483647, %v647
  %vm658 = vcmp.eq.f32.partialorder %v657, 8.507059e+37
  %v659 = vand.u32 %v647, 2147483648
  %v660 = vor.u32 1.1754944e-38, %v659
  %v661 = vsel %vm658, %v660, %v656
  %v662 = vmul.f32 1.0, %v661
  %v663 = vrot.slane %v616, 6
  %664 = vrot.lane.b32.xlu0 %v663, 32
  %v665 = vpop.permute.xlu0 %664
  %v667 = vmul.f32 %v662, %v665
  %v669 = vrot.slane %v667, 2
  %670 = vrot.lane.b32.xlu0 %v669, 96
  %v671 = vpop.permute.xlu0 %670
  %v672 = vsel %vm45, %v671, 0
  %674 = vmatpush.msra.mxu0 0.0
  %675 = vmatpush.msra.mxu0 0.0
  %676 = vmatpush.msra.mxu0 0.0
  %677 = vmatpush.msra.mxu0 0.0
  %678 = vmatpush.msra.mxu0 0.0
  %679 = vmatpush.msra.mxu0 0.0
  %680 = vmatpush.msra.mxu0 0.0
  %681 = vmatpush.msra.mxu0 0.0
  %682 = vmatpush.msra.mxu0 0.0
  %683 = vmatpush.msra.mxu0 0.0
  %684 = vmatpush.msra.mxu0 0.0
  %685 = vmatpush.msra.mxu0 0.0
  %686 = vmatpush.msra.mxu0 %v38
  %687 = vmatpush.msra.mxu0 %v37
  %688 = vmatpush.msra.mxu0 %v36
  %689 = vmatpush.msra.mxu0 %v35
  %690 = vmatmul.f32.gmra.mxu0 %v672
  %v691 = vpop.f32.mrf.mxu0
  %v692 = vadd.f32 0.0, %v691
  %693 = vdwg.mxu0
  %v695 = vrot.slane %v692, 6
  %696 = vrot.lane.b32.xlu0 %v695, 64
  %v697 = vpop.permute.xlu0 %696
  %v699 = vadd.f32 %v643, %v697
  %v700 = vxor.u32 %v699, 2147483648
  %v701 = vmul.f32 %v700, 1.442695
  %v702 = vpow.pop %v701
  %v703 = vadd.f32 %v702, 1.0
  %v704 = vrcp.pop %v703
  %v705 = vmul.f32 %v703, %v704
  %v706 = vsub.f32 1.0, %v705
  %v707 = vmul.f32 %v704, %v706
  %v708 = vadd.f32 %v704, %v707
  %vm709 = vweird.f32 %v703
  %vm710 = vweird.f32 %v704
  %vm711 = vmor %vm709, %vm710
  %v712 = vsel %vm711, %v704, %v708
  %v713 = vand.u32 2147483647, %v703
  %vm714 = vcmp.eq.f32.partialorder %v713, 8.507059e+37
  %v715 = vand.u32 %v703, 2147483648
  %v716 = vor.u32 1.1754944e-38, %v715
  %v717 = vsel %vm714, %v716, %v712
  %v718 = vmul.f32 1.0, %v717
  %v719 = vsub.f32 1.0, %v662
  %v721 = vmul.f32 %v719, %v663
  %723 = vrot.lane.b32.xlu0 %v718, 64
  %v724 = vpop.permute.xlu0 %723
  %v726 = vmul.f32 %v662, %v724
  %v727 = vadd.f32 %v721, %v726
  %v729 = vrot.slane %v727, 2
  %v730 = vsel %vm45, %v729, 0
  %732 = vmatpush.msra.mxu0 0.0
  %733 = vmatpush.msra.mxu0 0.0
  %734 = vmatpush.msra.mxu0 0.0
  %735 = vmatpush.msra.mxu0 0.0
  %736 = vmatpush.msra.mxu0 0.0
  %737 = vmatpush.msra.mxu0 0.0
  %738 = vmatpush.msra.mxu0 0.0
  %739 = vmatpush.msra.mxu0 0.0
  %740 = vmatpush.msra.mxu0 0.0
  %741 = vmatpush.msra.mxu0 0.0
  %742 = vmatpush.msra.mxu0 0.0
  %743 = vmatpush.msra.mxu0 0.0
  %744 = vmatpush.msra.mxu0 %v34
  %745 = vmatpush.msra.mxu0 %v33
  %746 = vmatpush.msra.mxu0 %v32
  %747 = vmatpush.msra.mxu0 %v31
  %748 = vmatmul.f32.gmra.mxu0 %v730
  %v749 = vpop.f32.mrf.mxu0
  %v750 = vadd.f32 0.0, %v749
  %751 = vdwg.mxu0
  %v753 = vrot.slane %v750, 4
  %v755 = vadd.f32 %v73, %v753
  %v756 = vxor.u32 %v755, 2147483648
  %v757 = vmul.f32 %v756, 1.442695
  %v758 = vpow.pop %v757
  %v759 = vadd.f32 %v758, 1.0
  %v760 = vrcp.pop %v759
  %v761 = vmul.f32 %v759, %v760
  %v762 = vsub.f32 1.0, %v761
  %v763 = vmul.f32 %v760, %v762
  %v764 = vadd.f32 %v760, %v763
  %vm765 = vweird.f32 %v759
  %vm766 = vweird.f32 %v760
  %vm767 = vmor %vm765, %vm766
  %v768 = vsel %vm767, %v760, %v764
  %v769 = vand.u32 2147483647, %v759
  %vm770 = vcmp.eq.f32.partialorder %v769, 8.507059e+37
  %v771 = vand.u32 %v759, 2147483648
  %v772 = vor.u32 1.1754944e-38, %v771
  %v773 = vsel %vm770, %v772, %v768
  %v774 = vmul.f32 1.0, %v773
  %v775 = vrot.slane %v727, 6
  %776 = vrot.lane.b32.xlu0 %v775, 32
  %v777 = vpop.permute.xlu0 %776
  %v779 = vmul.f32 %v774, %v777
  %v781 = vrot.slane %v779, 4
  %782 = vrot.lane.b32.xlu0 %v781, 96
  %v783 = vpop.permute.xlu0 %782
  %v784 = vsel %vm45, %v783, 0
  %786 = vmatpush.msra.mxu0 0.0
  %787 = vmatpush.msra.mxu0 0.0
  %788 = vmatpush.msra.mxu0 0.0
  %789 = vmatpush.msra.mxu0 0.0
  %790 = vmatpush.msra.mxu0 0.0
  %791 = vmatpush.msra.mxu0 0.0
  %792 = vmatpush.msra.mxu0 0.0
  %793 = vmatpush.msra.mxu0 0.0
  %794 = vmatpush.msra.mxu0 0.0
  %795 = vmatpush.msra.mxu0 0.0
  %796 = vmatpush.msra.mxu0 0.0
  %797 = vmatpush.msra.mxu0 0.0
  %798 = vmatpush.msra.mxu0 %v38
  %799 = vmatpush.msra.mxu0 %v37
  %800 = vmatpush.msra.mxu0 %v36
  %801 = vmatpush.msra.mxu0 %v35
  %802 = vmatmul.f32.gmra.mxu0 %v784
  %v803 = vpop.f32.mrf.mxu0
  %v804 = vadd.f32 0.0, %v803
  %805 = vdwg.mxu0
  %v807 = vrot.slane %v804, 4
  %808 = vrot.lane.b32.xlu0 %v807, 64
  %v809 = vpop.permute.xlu0 %808
  %v811 = vadd.f32 %v755, %v809
  %v812 = vxor.u32 %v811, 2147483648
  %v813 = vmul.f32 %v812, 1.442695
  %v814 = vpow.pop %v813
  %v815 = vadd.f32 %v814, 1.0
  %v816 = vrcp.pop %v815
  %v817 = vmul.f32 %v815, %v816
  %v818 = vsub.f32 1.0, %v817
  %v819 = vmul.f32 %v816, %v818
  %v820 = vadd.f32 %v816, %v819
  %vm821 = vweird.f32 %v815
  %vm822 = vweird.f32 %v816
  %vm823 = vmor %vm821, %vm822
  %v824 = vsel %vm823, %v816, %v820
  %v825 = vand.u32 2147483647, %v815
  %vm826 = vcmp.eq.f32.partialorder %v825, 8.507059e+37
  %v827 = vand.u32 %v815, 2147483648
  %v828 = vor.u32 1.1754944e-38, %v827
  %v829 = vsel %vm826, %v828, %v824
  %v830 = vmul.f32 1.0, %v829
  %v831 = vsub.f32 1.0, %v774
  %v833 = vmul.f32 %v831, %v775
  %835 = vrot.lane.b32.xlu0 %v830, 64
  %v836 = vpop.permute.xlu0 %835
  %v838 = vmul.f32 %v774, %v836
  %v839 = vadd.f32 %v833, %v838
  %v841 = vrot.slane %v839, 4
  %v842 = vsel %vm45, %v841, 0
  %844 = vmatpush.msra.mxu0 0.0
  %845 = vmatpush.msra.mxu0 0.0
  %846 = vmatpush.msra.mxu0 0.0
  %847 = vmatpush.msra.mxu0 0.0
  %848 = vmatpush.msra.mxu0 0.0
  %849 = vmatpush.msra.mxu0 0.0
  %850 = vmatpush.msra.mxu0 0.0
  %851 = vmatpush.msra.mxu0 0.0
  %852 = vmatpush.msra.mxu0 0.0
  %853 = vmatpush.msra.mxu0 0.0
  %854 = vmatpush.msra.mxu0 0.0
  %855 = vmatpush.msra.mxu0 0.0
  %856 = vmatpush.msra.mxu0 %v34
  %857 = vmatpush.msra.mxu0 %v33
  %858 = vmatpush.msra.mxu0 %v32
  %859 = vmatpush.msra.mxu0 %v31
  %860 = vmatmul.f32.gmra.mxu0 %v842
  %v861 = vpop.f32.mrf.mxu0
  %v862 = vadd.f32 0.0, %v861
  %863 = vdwg.mxu0
  %v865 = vrot.slane %v862, 2
  %v867 = vadd.f32 %v73, %v865
  %v868 = vxor.u32 %v867, 2147483648
  %v869 = vmul.f32 %v868, 1.442695
  %v870 = vpow.pop %v869
  %v871 = vadd.f32 %v870, 1.0
  %v872 = vrcp.pop %v871
  %v873 = vmul.f32 %v871, %v872
  %v874 = vsub.f32 1.0, %v873
  %v875 = vmul.f32 %v872, %v874
  %v876 = vadd.f32 %v872, %v875
  %vm877 = vweird.f32 %v871
  %vm878 = vweird.f32 %v872
  %vm879 = vmor %vm877, %vm878
  %v880 = vsel %vm879, %v872, %v876
  %v881 = vand.u32 2147483647, %v871
  %vm882 = vcmp.eq.f32.partialorder %v881, 8.507059e+37
  %v883 = vand.u32 %v871, 2147483648
  %v884 = vor.u32 1.1754944e-38, %v883
  %v885 = vsel %vm882, %v884, %v880
  %v886 = vmul.f32 1.0, %v885
  %v887 = vrot.slane %v839, 6
  %888 = vrot.lane.b32.xlu0 %v887, 32
  %v889 = vpop.permute.xlu0 %888
  %v891 = vmul.f32 %v886, %v889
  %v893 = vrot.slane %v891, 6
  %894 = vrot.lane.b32.xlu0 %v893, 96
  %v895 = vpop.permute.xlu0 %894
  %v896 = vsel %vm45, %v895, 0
  %898 = vmatpush.msra.mxu0 0.0
  %899 = vmatpush.msra.mxu0 0.0
  %900 = vmatpush.msra.mxu0 0.0
  %901 = vmatpush.msra.mxu0 0.0
  %902 = vmatpush.msra.mxu0 0.0
  %903 = vmatpush.msra.mxu0 0.0
  %904 = vmatpush.msra.mxu0 0.0
  %905 = vmatpush.msra.mxu0 0.0
  %906 = vmatpush.msra.mxu0 0.0
  %907 = vmatpush.msra.mxu0 0.0
  %908 = vmatpush.msra.mxu0 0.0
  %909 = vmatpush.msra.mxu0 0.0
  %910 = vmatpush.msra.mxu0 %v38
  %911 = vmatpush.msra.mxu0 %v37
  %912 = vmatpush.msra.mxu0 %v36
  %913 = vmatpush.msra.mxu0 %v35
  %914 = vmatmul.f32.gmra.mxu0 %v896
  %v915 = vpop.f32.mrf.mxu0
  %v916 = vadd.f32 0.0, %v915
  %917 = vdwg.mxu0
  %v919 = vrot.slane %v916, 2
  %920 = vrot.lane.b32.xlu0 %v919, 64
  %v921 = vpop.permute.xlu0 %920
  %v923 = vadd.f32 %v867, %v921
  %v924 = vxor.u32 %v923, 2147483648
  %v925 = vmul.f32 %v924, 1.442695
  %v926 = vpow.pop %v925
  %v927 = vadd.f32 %v926, 1.0
  %v928 = vrcp.pop %v927
  %v929 = vmul.f32 %v927, %v928
  %v930 = vsub.f32 1.0, %v929
  %v931 = vmul.f32 %v928, %v930
  %v932 = vadd.f32 %v928, %v931
  %vm933 = vweird.f32 %v927
  %vm934 = vweird.f32 %v928
  %vm935 = vmor %vm933, %vm934
  %v936 = vsel %vm935, %v928, %v932
  %v937 = vand.u32 2147483647, %v927
  %vm938 = vcmp.eq.f32.partialorder %v937, 8.507059e+37
  %v939 = vand.u32 %v927, 2147483648
  %v940 = vor.u32 1.1754944e-38, %v939
  %v941 = vsel %vm938, %v940, %v936
  %v942 = vmul.f32 1.0, %v941
  %v943 = vsub.f32 1.0, %v886
  %v945 = vmul.f32 %v943, %v887
  %947 = vrot.lane.b32.xlu0 %v942, 64
  %v948 = vpop.permute.xlu0 %947
  %v950 = vmul.f32 %v886, %v948
  %v951 = vadd.f32 %v945, %v950
  %v953 = vrot.slane %v951, 6
  %v954 = vsel %vm45, %v953, 0
  %956 = vmatpush.msra.mxu0 0.0
  %957 = vmatpush.msra.mxu0 0.0
  %958 = vmatpush.msra.mxu0 0.0
  %959 = vmatpush.msra.mxu0 0.0
  %960 = vmatpush.msra.mxu0 0.0
  %961 = vmatpush.msra.mxu0 0.0
  %962 = vmatpush.msra.mxu0 0.0
  %963 = vmatpush.msra.mxu0 0.0
  %964 = vmatpush.msra.mxu0 0.0
  %965 = vmatpush.msra.mxu0 0.0
  %966 = vmatpush.msra.mxu0 0.0
  %967 = vmatpush.msra.mxu0 0.0
  %968 = vmatpush.msra.mxu0 %v30
  %969 = vmatpush.msra.mxu0 %v29
  %970 = vmatpush.msra.mxu0 %v28
  %971 = vmatpush.msra.mxu0 %v27
  %972 = vmatmul.f32.gmra.mxu0 %v954
  %v973 = vpop.f32.mrf.mxu0
  %v974 = vadd.f32 %v41, %v973
  %975 = vdwg.mxu0
  %v976 = vxor.u32 %v974, 2147483648
  %v977 = vmul.f32 %v976, 1.442695
  %v978 = vpow.pop %v977
  %v979 = vadd.f32 %v978, 1.0
  %v980 = vrcp.pop %v979
  %v981 = vmul.f32 %v979, %v980
  %v982 = vsub.f32 1.0, %v981
  %v983 = vmul.f32 %v980, %v982
  %v984 = vadd.f32 %v980, %v983
  %vm985 = vweird.f32 %v979
  %vm986 = vweird.f32 %v980
  %vm987 = vmor %vm985, %vm986
  %v988 = vsel %vm987, %v980, %v984
  %v989 = vand.u32 2147483647, %v979
  %vm990 = vcmp.eq.f32.partialorder %v989, 8.507059e+37
  %v991 = vand.u32 %v979, 2147483648
  %v992 = vor.u32 1.1754944e-38, %v991
  %v993 = vsel %vm990, %v992, %v988
  %v994 = vmul.f32 1.0, %v993
  %995 = vrot.lane.b32.xlu0 %v953, 32
  %v996 = vpop.permute.xlu0 %995
  %v998 = vmul.f32 %v994, %v996
  %1000 = vrot.lane.b32.xlu0 %v998, 96
  %v1001 = vpop.permute.xlu0 %1000
  %v1002 = vsel %vm45, %v1001, 0
  %1004 = vmatpush.msra.mxu0 0.0
  %1005 = vmatpush.msra.mxu0 0.0
  %1006 = vmatpush.msra.mxu0 0.0
  %1007 = vmatpush.msra.mxu0 0.0
  %1008 = vmatpush.msra.mxu0 0.0
  %1009 = vmatpush.msra.mxu0 0.0
  %1010 = vmatpush.msra.mxu0 0.0
  %1011 = vmatpush.msra.mxu0 0.0
  %1012 = vmatpush.msra.mxu0 0.0
  %1013 = vmatpush.msra.mxu0 0.0
  %1014 = vmatpush.msra.mxu0 0.0
  %1015 = vmatpush.msra.mxu0 0.0
  %1016 = vmatpush.msra.mxu0 %v38
  %1017 = vmatpush.msra.mxu0 %v37
  %1018 = vmatpush.msra.mxu0 %v36
  %1019 = vmatpush.msra.mxu0 %v35
  %1020 = vmatmul.f32.gmra.mxu0 %v1002
  %v1021 = vpop.f32.mrf.mxu0
  %v1022 = vadd.f32 0.0, %v1021
  %1023 = vdwg.mxu0
  %1025 = vrot.lane.b32.xlu0 %v1022, 64
  %v1026 = vpop.permute.xlu0 %1025
  %v1028 = vadd.f32 %v974, %v1026
  %v1029 = vxor.u32 %v1028, 2147483648
  %v1030 = vmul.f32 %v1029, 1.442695
  %v1031 = vpow.pop %v1030
  %v1032 = vadd.f32 %v1031, 1.0
  %v1033 = vrcp.pop %v1032
  %v1034 = vmul.f32 %v1032, %v1033
  %v1035 = vsub.f32 1.0, %v1034
  %v1036 = vmul.f32 %v1033, %v1035
  %v1037 = vadd.f32 %v1033, %v1036
  %vm1038 = vweird.f32 %v1032
  %vm1039 = vweird.f32 %v1033
  %vm1040 = vmor %vm1038, %vm1039
  %v1041 = vsel %vm1040, %v1033, %v1037
  %v1042 = vand.u32 2147483647, %v1032
  %vm1043 = vcmp.eq.f32.partialorder %v1042, 8.507059e+37
  %v1044 = vand.u32 %v1032, 2147483648
  %v1045 = vor.u32 1.1754944e-38, %v1044
  %v1046 = vsel %vm1043, %v1045, %v1041
  %v1047 = vmul.f32 1.0, %v1046
  %v1048 = vsub.f32 1.0, %v994
  %v1050 = vmul.f32 %v1048, %v953
  %1052 = vrot.lane.b32.xlu0 %v1047, 64
  %v1053 = vpop.permute.xlu0 %1052
  %v1055 = vmul.f32 %v994, %v1053
  %v1056 = vadd.f32 %v1050, %v1055
  %vm1057 = vcmask 254976
  %1058 = vst.msk [vmem:[%s6] sm:$0x3] %vm1057, %v1056
  %v1060 = vsel %vm45, %v1056, 0
  %1062 = vmatpush.msra.mxu0 0.0
  %1063 = vmatpush.msra.mxu0 0.0
  %1064 = vmatpush.msra.mxu0 0.0
  %1065 = vmatpush.msra.mxu0 0.0
  %1066 = vmatpush.msra.mxu0 0.0
  %1067 = vmatpush.msra.mxu0 0.0
  %1068 = vmatpush.msra.mxu0 0.0
  %1069 = vmatpush.msra.mxu0 0.0
  %1070 = vmatpush.msra.mxu0 0.0
  %1071 = vmatpush.msra.mxu0 0.0
  %1072 = vmatpush.msra.mxu0 0.0
  %1073 = vmatpush.msra.mxu0 0.0
  %1074 = vmatpush.msra.mxu0 %v30
  %1075 = vmatpush.msra.mxu0 %v29
  %1076 = vmatpush.msra.mxu0 %v28
  %1077 = vmatpush.msra.mxu0 %v27
  %1078 = vmatmul.f32.gmra.mxu0 %v1060
  %v1079 = vpop.f32.mrf.mxu0
  %v1080 = vadd.f32 %v41, %v1079
  %1081 = vdwg.mxu0
  %v1082 = vxor.u32 %v1080, 2147483648
  %v1083 = vmul.f32 %v1082, 1.442695
  %v1084 = vpow.pop %v1083
  %v1085 = vadd.f32 %v1084, 1.0
  %v1086 = vrcp.pop %v1085
  %v1087 = vmul.f32 %v1085, %v1086
  %v1088 = vsub.f32 1.0, %v1087
  %v1089 = vmul.f32 %v1086, %v1088
  %v1090 = vadd.f32 %v1086, %v1089
  %vm1091 = vweird.f32 %v1085
  %vm1092 = vweird.f32 %v1086
  %vm1093 = vmor %vm1091, %vm1092
  %v1094 = vsel %vm1093, %v1086, %v1090
  %v1095 = vand.u32 2147483647, %v1085
  %vm1096 = vcmp.eq.f32.partialorder %v1095, 8.507059e+37
  %v1097 = vand.u32 %v1085, 2147483648
  %v1098 = vor.u32 1.1754944e-38, %v1097
  %v1099 = vsel %vm1096, %v1098, %v1094
  %v1100 = vmul.f32 1.0, %v1099
  %1101 = vrot.lane.b32.xlu0 %v1056, 32
  %v1102 = vpop.permute.xlu0 %1101
  %v1104 = vmul.f32 %v1100, %v1102
  %1106 = vrot.lane.b32.xlu0 %v1104, 96
  %v1107 = vpop.permute.xlu0 %1106
  %v1108 = vsel %vm45, %v1107, 0
  %1110 = vmatpush.msra.mxu0 0.0
  %1111 = vmatpush.msra.mxu0 0.0
  %1112 = vmatpush.msra.mxu0 0.0
  %1113 = vmatpush.msra.mxu0 0.0
  %1114 = vmatpush.msra.mxu0 0.0
  %1115 = vmatpush.msra.mxu0 0.0
  %1116 = vmatpush.msra.mxu0 0.0
  %1117 = vmatpush.msra.mxu0 0.0
  %1118 = vmatpush.msra.mxu0 0.0
  %1119 = vmatpush.msra.mxu0 0.0
  %1120 = vmatpush.msra.mxu0 0.0
  %1121 = vmatpush.msra.mxu0 0.0
  %1122 = vmatpush.msra.mxu0 %v38
  %1123 = vmatpush.msra.mxu0 %v37
  %1124 = vmatpush.msra.mxu0 %v36
  %1125 = vmatpush.msra.mxu0 %v35
  %1126 = vmatmul.f32.gmra.mxu0 %v1108
  %v1127 = vpop.f32.mrf.mxu0
  %v1128 = vadd.f32 0.0, %v1127
  %1129 = vdwg.mxu0
  %1131 = vrot.lane.b32.xlu0 %v1128, 64
  %v1132 = vpop.permute.xlu0 %1131
  %v1134 = vadd.f32 %v1080, %v1132
  %v1135 = vxor.u32 %v1134, 2147483648
  %v1136 = vmul.f32 %v1135, 1.442695
  %v1137 = vpow.pop %v1136
  %v1138 = vadd.f32 %v1137, 1.0
  %v1139 = vrcp.pop %v1138
  %v1140 = vmul.f32 %v1138, %v1139
  %v1141 = vsub.f32 1.0, %v1140
  %v1142 = vmul.f32 %v1139, %v1141
  %v1143 = vadd.f32 %v1139, %v1142
  %vm1144 = vweird.f32 %v1138
  %vm1145 = vweird.f32 %v1139
  %vm1146 = vmor %vm1144, %vm1145
  %v1147 = vsel %vm1146, %v1139, %v1143
  %v1148 = vand.u32 2147483647, %v1138
  %vm1149 = vcmp.eq.f32.partialorder %v1148, 8.507059e+37
  %v1150 = vand.u32 %v1138, 2147483648
  %v1151 = vor.u32 1.1754944e-38, %v1150
  %v1152 = vsel %vm1149, %v1151, %v1147
  %v1153 = vmul.f32 1.0, %v1152
  %v1154 = vsub.f32 1.0, %v1100
  %v1155 = vmul.f32 %v1154, %v1056
  %1157 = vrot.lane.b32.xlu0 %v1153, 64
  %v1158 = vpop.permute.xlu0 %1157
  %v1160 = vmul.f32 %v1100, %v1158
  %v1161 = vadd.f32 %v1155, %v1160
  %1163 = vrot.lane.b32.xlu0 %v1161, 32
  %v1164 = vpop.permute.xlu0 %1163
  %vm1166 = vcmask 517376
  %1167 = vst.msk [vmem:[%s6] sm:$0x3] %vm1166, %v1164
  %v1168 = vsel %vm45, %v1161, 0
  %1170 = vmatpush.msra.mxu0 0.0
  %1171 = vmatpush.msra.mxu0 0.0
  %1172 = vmatpush.msra.mxu0 0.0
  %1173 = vmatpush.msra.mxu0 0.0
  %1174 = vmatpush.msra.mxu0 0.0
  %1175 = vmatpush.msra.mxu0 0.0
  %1176 = vmatpush.msra.mxu0 0.0
  %1177 = vmatpush.msra.mxu0 0.0
  %1178 = vmatpush.msra.mxu0 0.0
  %1179 = vmatpush.msra.mxu0 0.0
  %1180 = vmatpush.msra.mxu0 0.0
  %1181 = vmatpush.msra.mxu0 0.0
  %1182 = vmatpush.msra.mxu0 %v30
  %1183 = vmatpush.msra.mxu0 %v29
  %1184 = vmatpush.msra.mxu0 %v28
  %1185 = vmatpush.msra.mxu0 %v27
  %1186 = vmatmul.f32.gmra.mxu0 %v1168
  %v1187 = vpop.f32.mrf.mxu0
  %v1188 = vadd.f32 %v41, %v1187
  %1189 = vdwg.mxu0
  %v1190 = vxor.u32 %v1188, 2147483648
  %v1191 = vmul.f32 %v1190, 1.442695
  %v1192 = vpow.pop %v1191
  %v1193 = vadd.f32 %v1192, 1.0
  %v1194 = vrcp.pop %v1193
  %v1195 = vmul.f32 %v1193, %v1194
  %v1196 = vsub.f32 1.0, %v1195
  %v1197 = vmul.f32 %v1194, %v1196
  %v1198 = vadd.f32 %v1194, %v1197
  %vm1199 = vweird.f32 %v1193
  %vm1200 = vweird.f32 %v1194
  %vm1201 = vmor %vm1199, %vm1200
  %v1202 = vsel %vm1201, %v1194, %v1198
  %v1203 = vand.u32 2147483647, %v1193
  %vm1204 = vcmp.eq.f32.partialorder %v1203, 8.507059e+37
  %v1205 = vand.u32 %v1193, 2147483648
  %v1206 = vor.u32 1.1754944e-38, %v1205
  %v1207 = vsel %vm1204, %v1206, %v1202
  %v1208 = vmul.f32 1.0, %v1207
  %v1209 = vmul.f32 %v1208, %v1164
  %1211 = vrot.lane.b32.xlu0 %v1209, 96
  %v1212 = vpop.permute.xlu0 %1211
  %v1213 = vsel %vm45, %v1212, 0
  %1215 = vmatpush.msra.mxu0 0.0
  %1216 = vmatpush.msra.mxu0 0.0
  %1217 = vmatpush.msra.mxu0 0.0
  %1218 = vmatpush.msra.mxu0 0.0
  %1219 = vmatpush.msra.mxu0 0.0
  %1220 = vmatpush.msra.mxu0 0.0
  %1221 = vmatpush.msra.mxu0 0.0
  %1222 = vmatpush.msra.mxu0 0.0
  %1223 = vmatpush.msra.mxu0 0.0
  %1224 = vmatpush.msra.mxu0 0.0
  %1225 = vmatpush.msra.mxu0 0.0
  %1226 = vmatpush.msra.mxu0 0.0
  %1227 = vmatpush.msra.mxu0 %v38
  %1228 = vmatpush.msra.mxu0 %v37
  %1229 = vmatpush.msra.mxu0 %v36
  %1230 = vmatpush.msra.mxu0 %v35
  %1231 = vmatmul.f32.gmra.mxu0 %v1213
  %v1232 = vpop.f32.mrf.mxu0
  %v1233 = vadd.f32 0.0, %v1232
  %1234 = vdwg.mxu0
  %1236 = vrot.lane.b32.xlu0 %v1233, 64
  %v1237 = vpop.permute.xlu0 %1236
  %v1239 = vadd.f32 %v1188, %v1237
  %v1240 = vxor.u32 %v1239, 2147483648
  %v1241 = vmul.f32 %v1240, 1.442695
  %v1242 = vpow.pop %v1241
  %v1243 = vadd.f32 %v1242, 1.0
  %v1244 = vrcp.pop %v1243
  %v1245 = vmul.f32 %v1243, %v1244
  %v1246 = vsub.f32 1.0, %v1245
  %v1247 = vmul.f32 %v1244, %v1246
  %v1248 = vadd.f32 %v1244, %v1247
  %vm1249 = vweird.f32 %v1243
  %vm1250 = vweird.f32 %v1244
  %vm1251 = vmor %vm1249, %vm1250
  %v1252 = vsel %vm1251, %v1244, %v1248
  %v1253 = vand.u32 2147483647, %v1243
  %vm1254 = vcmp.eq.f32.partialorder %v1253, 8.507059e+37
  %v1255 = vand.u32 %v1243, 2147483648
  %v1256 = vor.u32 1.1754944e-38, %v1255
  %v1257 = vsel %vm1254, %v1256, %v1252
  %v1258 = vmul.f32 1.0, %v1257
  %v1259 = vsub.f32 1.0, %v1208
  %v1260 = vmul.f32 %v1259, %v1161
  %1262 = vrot.lane.b32.xlu0 %v1258, 64
  %v1263 = vpop.permute.xlu0 %1262
  %v1265 = vmul.f32 %v1208, %v1263
  %v1266 = vadd.f32 %v1260, %v1265
  %1268 = vrot.lane.b32.xlu0 %v1266, 64
  %v1269 = vpop.permute.xlu0 %1268
  %vm1271 = vcmask 779776
  %1272 = vst.msk [vmem:[%s6] sm:$0x3] %vm1271, %v1269
  %v1273 = vsel %vm45, %v1266, 0
  %1275 = vmatpush.msra.mxu0 0.0
  %1276 = vmatpush.msra.mxu0 0.0
  %1277 = vmatpush.msra.mxu0 0.0
  %1278 = vmatpush.msra.mxu0 0.0
  %1279 = vmatpush.msra.mxu0 0.0
  %1280 = vmatpush.msra.mxu0 0.0
  %1281 = vmatpush.msra.mxu0 0.0
  %1282 = vmatpush.msra.mxu0 0.0
  %1283 = vmatpush.msra.mxu0 0.0
  %1284 = vmatpush.msra.mxu0 0.0
  %1285 = vmatpush.msra.mxu0 0.0
  %1286 = vmatpush.msra.mxu0 0.0
  %1287 = vmatpush.msra.mxu0 %v30
  %1288 = vmatpush.msra.mxu0 %v29
  %1289 = vmatpush.msra.mxu0 %v28
  %1290 = vmatpush.msra.mxu0 %v27
  %1291 = vmatmul.f32.gmra.mxu0 %v1273
  %v1292 = vpop.f32.mrf.mxu0
  %v1293 = vadd.f32 %v41, %v1292
  %1294 = vdwg.mxu0
  %v1295 = vxor.u32 %v1293, 2147483648
  %v1296 = vmul.f32 %v1295, 1.442695
  %v1297 = vpow.pop %v1296
  %v1298 = vadd.f32 %v1297, 1.0
  %v1299 = vrcp.pop %v1298
  %v1300 = vmul.f32 %v1298, %v1299
  %v1301 = vsub.f32 1.0, %v1300
  %v1302 = vmul.f32 %v1299, %v1301
  %v1303 = vadd.f32 %v1299, %v1302
  %vm1304 = vweird.f32 %v1298
  %vm1305 = vweird.f32 %v1299
  %vm1306 = vmor %vm1304, %vm1305
  %v1307 = vsel %vm1306, %v1299, %v1303
  %v1308 = vand.u32 2147483647, %v1298
  %vm1309 = vcmp.eq.f32.partialorder %v1308, 8.507059e+37
  %v1310 = vand.u32 %v1298, 2147483648
  %v1311 = vor.u32 1.1754944e-38, %v1310
  %v1312 = vsel %vm1309, %v1311, %v1307
  %v1313 = vmul.f32 1.0, %v1312
  %1314 = vrot.lane.b32.xlu0 %v1266, 32
  %v1315 = vpop.permute.xlu0 %1314
  %v1317 = vmul.f32 %v1313, %v1315
  %1319 = vrot.lane.b32.xlu0 %v1317, 96
  %v1320 = vpop.permute.xlu0 %1319
  %v1321 = vsel %vm45, %v1320, 0
  %1323 = vmatpush.msra.mxu0 0.0
  %1324 = vmatpush.msra.mxu0 0.0
  %1325 = vmatpush.msra.mxu0 0.0
  %1326 = vmatpush.msra.mxu0 0.0
  %1327 = vmatpush.msra.mxu0 0.0
  %1328 = vmatpush.msra.mxu0 0.0
  %1329 = vmatpush.msra.mxu0 0.0
  %1330 = vmatpush.msra.mxu0 0.0
  %1331 = vmatpush.msra.mxu0 0.0
  %1332 = vmatpush.msra.mxu0 0.0
  %1333 = vmatpush.msra.mxu0 0.0
  %1334 = vmatpush.msra.mxu0 0.0
  %1335 = vmatpush.msra.mxu0 %v38
  %1336 = vmatpush.msra.mxu0 %v37
  %1337 = vmatpush.msra.mxu0 %v36
  %1338 = vmatpush.msra.mxu0 %v35
  %1339 = vmatmul.f32.gmra.mxu0 %v1321
  %v1340 = vpop.f32.mrf.mxu0
  %v1341 = vadd.f32 0.0, %v1340
  %1342 = vdwg.mxu0
  %1344 = vrot.lane.b32.xlu0 %v1341, 64
  %v1345 = vpop.permute.xlu0 %1344
  %v1347 = vadd.f32 %v1293, %v1345
  %v1348 = vxor.u32 %v1347, 2147483648
  %v1349 = vmul.f32 %v1348, 1.442695
  %v1350 = vpow.pop %v1349
  %v1351 = vadd.f32 %v1350, 1.0
  %v1352 = vrcp.pop %v1351
  %v1353 = vmul.f32 %v1351, %v1352
  %v1354 = vsub.f32 1.0, %v1353
  %v1355 = vmul.f32 %v1352, %v1354
  %v1356 = vadd.f32 %v1352, %v1355
  %vm1357 = vweird.f32 %v1351
  %vm1358 = vweird.f32 %v1352
  %vm1359 = vmor %vm1357, %vm1358
  %v1360 = vsel %vm1359, %v1352, %v1356
  %v1361 = vand.u32 2147483647, %v1351
  %vm1362 = vcmp.eq.f32.partialorder %v1361, 8.507059e+37
  %v1363 = vand.u32 %v1351, 2147483648
  %v1364 = vor.u32 1.1754944e-38, %v1363
  %v1365 = vsel %vm1362, %v1364, %v1360
  %v1366 = vmul.f32 1.0, %v1365
  %v1367 = vsub.f32 1.0, %v1313
  %v1368 = vmul.f32 %v1367, %v1266
  %1370 = vrot.lane.b32.xlu0 %v1366, 64
  %v1371 = vpop.permute.xlu0 %1370
  %v1373 = vmul.f32 %v1313, %v1371
  %v1374 = vadd.f32 %v1368, %v1373
  %1376 = vrot.lane.b32.xlu0 %v1374, 96
  %v1377 = vpop.permute.xlu0 %1376
  %vm1379 = vcmask 1042176
  %1380 = vst.msk [vmem:[%s6] sm:$0x3] %vm1379, %v1377
  // Predicated region
  $region26: #{many_to_many_gru.1} parent=0 // pred_check
    _
  $region27: #{many_to_many_gru.1} parent=0 // pred_check_branch
    %1382 = sbr.rel (0) target = $region29
  $region28: #{many_to_many_gru.1} parent=0 // pred_region
    _
  $region29: #{many_to_many_gru.1} parent=0 // pred_fallthru
    _
  // Predicated region
  $region30: #{many_to_many_gru.1} parent=0 // pred_check
    _
  $region31: #{many_to_many_gru.1} parent=0 // pred_check_branch
    %1384 = sbr.rel (0) target = $region33
  $region32: #{many_to_many_gru.1} parent=0 // pred_region
    _
  $region33: #{many_to_many_gru.1} parent=0 // pred_fallthru
    _

</llo_original>
